<compile_context>
chip_gen: v7x
topology: tpu7x:2x2x1
jax: 0.10.0
libtpu: 0.0.40
codegen_flags: <defaults>
</compile_context>

<pallas_src>
import math

import jax
import jax.numpy as jnp
from jax import lax
from jax.experimental import pallas as pl
from jax.experimental.pallas import tpu as pltpu


def deep_mlp_kernel(x_ref,
                    wt1_ref, b1_ref,
                    wt2_ref, b2_ref,
                    wt3_ref, b3_ref,
                    wt4_ref, b4_ref,
                    w5_ref, b5_ref,
                    out_ref):
    # x_ref: (tb, 20) f32.  wt{1..4}: (in, out) f32.  b{1..4}: (1, out) f32.
    # w5: (10, 60) f32.  b5: (10, 1) f32.  out_ref: (10, tb) f32.
    x = x_ref[...]

    h = jnp.dot(x, wt1_ref[...], preferred_element_type=jnp.float32) + b1_ref[...]
    h = jnp.maximum(h, 0.0)
    h = jnp.dot(h, wt2_ref[...], preferred_element_type=jnp.float32) + b2_ref[...]
    h = jnp.maximum(h, 0.0)
    h = jnp.dot(h, wt3_ref[...], preferred_element_type=jnp.float32) + b3_ref[...]
    h = jnp.maximum(h, 0.0)
    h = jnp.dot(h, wt4_ref[...], preferred_element_type=jnp.float32) + b4_ref[...]
    h = jnp.maximum(h, 0.0)

    # Output layer directly in class-major layout for a lane-dense store:
    # contract the 60-axis of (10, 60) and (tb, 60) -> (10, tb).
    logits = lax.dot_general(
        w5_ref[...], h, (((1,), (1,)), ((), ())),
        preferred_element_type=jnp.float32) + b5_ref[...]

    # Stable log-softmax over the class axis (axis 0 in class-major layout).
    m = jnp.max(logits, axis=0, keepdims=True)
    shifted = logits - m
    lse = jnp.log(jnp.sum(jnp.exp(shifted), axis=0, keepdims=True))
    out_ref[...] = (shifted - lse).astype(out_ref.dtype)


def prepare_params(params):
    """One-time conversion of PyTorch-layout params (w: (out,in), b: (out,))
    into the kernel layout.  Do this once; not per forward call."""
    prep = {}
    for i in range(1, 5):
        prep[f"wt{i}"] = jnp.asarray(params[f"w{i}"], jnp.float32).T        # (in, out)
        prep[f"b{i}"] = jnp.asarray(params[f"b{i}"], jnp.float32)[None, :]  # (1, out)
    prep["w5"] = jnp.asarray(params["w5"], jnp.float32)                     # (10, 60)
    prep["b5"] = jnp.asarray(params["b5"], jnp.float32)[:, None]            # (10, 1)
    return prep


def deep_forward(x, prep, *, tb=2048):
    """x: (B, 20) float32.  prep: output of prepare_params.
    Returns (B, 10) float32 log-probabilities."""
    B, f_in = x.shape
    n_classes = prep["w5"].shape[0]

    # Batch tile: multiple of 128 (lane axis of the output block), clamped so
    # the grid has >= 2 steps when B allows it (v7x megacore sharding).
    half = pl.cdiv(B, 2)
    tb_eff = min(tb, max(128, 128 * pl.cdiv(half, 128)))
    grid = (pl.cdiv(B, tb_eff),)

    def resident(shape):
        # Whole-array block + constant block index -> fetched once, stays in VMEM.
        return pl.BlockSpec(shape, lambda i: (0, 0))

    in_specs = [
        pl.BlockSpec((tb_eff, f_in), lambda i: (i, 0)),   # x tile follows the batch grid
        resident(prep["wt1"].shape), resident(prep["b1"].shape),
        resident(prep["wt2"].shape), resident(prep["b2"].shape),
        resident(prep["wt3"].shape), resident(prep["b3"].shape),
        resident(prep["wt4"].shape), resident(prep["b4"].shape),
        resident(prep["w5"].shape), resident(prep["b5"].shape),
    ]
    out_specs = pl.BlockSpec((n_classes, tb_eff), lambda i: (0, i))

    # Advisory cost estimate for the XLA scheduler.
    flops = 2 * B * (20 * 60 + 3 * 60 * 60 + 60 * 10)
    param_bytes = 4 * sum(int(v.size) for v in prep.values())
    bytes_accessed = B * f_in * 4 + B * n_classes * 4 + param_bytes
    cost = pl.CostEstimate(flops=flops,
                           transcendentals=B * (n_classes + 1),
                           bytes_accessed=bytes_accessed)

    out_t = pl.pallas_call(
        deep_mlp_kernel,
        out_shape=jax.ShapeDtypeStruct((n_classes, B), jnp.float32),
        grid=grid,
        in_specs=in_specs,
        out_specs=out_specs,
        compiler_params=pltpu.CompilerParams(
            dimension_semantics=("parallel",)),
        cost_estimate=cost,
    )(x,
      prep["wt1"], prep["b1"],
      prep["wt2"], prep["b2"],
      prep["wt3"], prep["b3"],
      prep["wt4"], prep["b4"],
      prep["w5"], prep["b5"])

    # Class-major (10, B) -> (B, 10); only the valid B columns are transposed.
    return out_t.T


def deep_reference(x, params):
    """Pure-JAX f32 reference of the PyTorch forward (for validation)."""
    h = x
    for i in range(1, 5):
        h = jnp.maximum(h @ params[f"w{i}"].T + params[f"b{i}"], 0.0)
    logits = h @ params["w5"].T + params["b5"]
    return jax.nn.log_softmax(logits, axis=-1)


def init_params(key):
    """Deterministic init mimicking PyTorch nn.Linear default
    (uniform(-1/sqrt(fan_in), 1/sqrt(fan_in))).  Weights stored (out, in)."""
    dims = [(20, 60), (60, 60), (60, 60), (60, 60), (60, 10)]
    params = {}
    for i, (fan_in, fan_out) in enumerate(dims, start=1):
        key, kw, kb = jax.random.split(key, 3)
        bound = 1.0 / math.sqrt(float(fan_in))
        params[f"w{i}"] = jax.random.uniform(
            kw, (fan_out, fan_in), jnp.float32, -bound, bound)
        params[f"b{i}"] = jax.random.uniform(
            kb, (fan_out,), jnp.float32, -bound, bound)
    return params


if __name__ == "__main__":
    key = jax.random.PRNGKey(0)
    key_x, key_p = jax.random.split(key)

    B = 200                       # not a tile multiple -> exercises ragged last block
    x = jax.random.normal(key_x, (B, 20), dtype=jnp.float32)
    params = init_params(key_p)
    prep = prepare_params(params)  # layout conversion hoisted out of the forward

    out = jax.block_until_ready(deep_forward(x, prep))
    ref = deep_reference(x, params)

    assert out.shape == (B, 10)
    # log-softmax rows must exp-sum to 1
    row_sums = jnp.sum(jnp.exp(out), axis=-1)
    assert bool(jnp.all(jnp.abs(row_sums - 1.0) < 1e-4))
    # all-f32 kernel vs f32 reference: tight tolerance
    assert bool(jnp.max(jnp.abs(out - ref)) < 1e-4)

    print("KERNEL_OK")
</pallas_src>

<mosaic_0001>
module attributes {stable_mosaic.version = 11 : i64} {
  func.func @deep_mlp_kernel(%arg0: i32, %arg1: memref<128x20xf32, #tpu.memory_space<vmem>>, %arg2: memref<20x60xf32, #tpu.memory_space<vmem>>, %arg3: memref<1x60xf32, #tpu.memory_space<vmem>>, %arg4: memref<60x60xf32, #tpu.memory_space<vmem>>, %arg5: memref<1x60xf32, #tpu.memory_space<vmem>>, %arg6: memref<60x60xf32, #tpu.memory_space<vmem>>, %arg7: memref<1x60xf32, #tpu.memory_space<vmem>>, %arg8: memref<60x60xf32, #tpu.memory_space<vmem>>, %arg9: memref<1x60xf32, #tpu.memory_space<vmem>>, %arg10: memref<10x60xf32, #tpu.memory_space<vmem>>, %arg11: memref<10x1xf32, #tpu.memory_space<vmem>>, %arg12: memref<10x128xf32, #tpu.memory_space<vmem>>) attributes {dimension_semantics = [#tpu.dimension_semantics<parallel>], iteration_bounds = array<i64: 2>, scalar_prefetch = 0 : i64, scratch_operands = 0 : i64, tpu.core_type = #tpu.core_type<tc>, window_params = [{transform_indices = @transform_0, window_bounds = array<i64: 128, 20>}, {pipeline_mode = #tpu.pipeline_mode<synchronous>, transform_indices = @transform_1, window_bounds = array<i64: 20, 60>}, {pipeline_mode = #tpu.pipeline_mode<synchronous>, transform_indices = @transform_2, window_bounds = array<i64: 1, 60>}, {pipeline_mode = #tpu.pipeline_mode<synchronous>, transform_indices = @transform_3, window_bounds = array<i64: 60, 60>}, {pipeline_mode = #tpu.pipeline_mode<synchronous>, transform_indices = @transform_4, window_bounds = array<i64: 1, 60>}, {pipeline_mode = #tpu.pipeline_mode<synchronous>, transform_indices = @transform_5, window_bounds = array<i64: 60, 60>}, {pipeline_mode = #tpu.pipeline_mode<synchronous>, transform_indices = @transform_6, window_bounds = array<i64: 1, 60>}, {pipeline_mode = #tpu.pipeline_mode<synchronous>, transform_indices = @transform_7, window_bounds = array<i64: 60, 60>}, {pipeline_mode = #tpu.pipeline_mode<synchronous>, transform_indices = @transform_8, window_bounds = array<i64: 1, 60>}, {pipeline_mode = #tpu.pipeline_mode<synchronous>, transform_indices = @transform_9, window_bounds = array<i64: 10, 60>}, {pipeline_mode = #tpu.pipeline_mode<synchronous>, transform_indices = @transform_10, window_bounds = array<i64: 10, 1>}, {transform_indices = @transform_11, window_bounds = array<i64: 10, 128>}]} {
    %c0 = arith.constant 0 : index
    %c0_0 = arith.constant 0 : index
    %0 = vector.load %arg1[%c0, %c0_0] : memref<128x20xf32, #tpu.memory_space<vmem>>, vector<128x20xf32>
    %c0_1 = arith.constant 0 : index
    %c0_2 = arith.constant 0 : index
    %1 = vector.load %arg2[%c0_1, %c0_2] : memref<20x60xf32, #tpu.memory_space<vmem>>, vector<20x60xf32>
    %cst = arith.constant dense<0.000000e+00> : vector<128x60xf32>
    %2 = tpu.matmul %0, %1, %cst {dimension_numbers = #tpu.dot_dimension_numbers<[1], [0], [0], [1], [0, 0, 1, 1], [], []>} : vector<128x20xf32>, vector<20x60xf32>, vector<128x60xf32> -> vector<128x60xf32>
    %c0_3 = arith.constant 0 : index
    %c0_4 = arith.constant 0 : index
    %3 = vector.load %arg3[%c0_3, %c0_4] : memref<1x60xf32, #tpu.memory_space<vmem>>, vector<1x60xf32>
    %4 = vector.broadcast %3 : vector<1x60xf32> to vector<128x60xf32>
    %5 = arith.addf %2, %4 : vector<128x60xf32>
    %cst_5 = arith.constant 0.000000e+00 : f32
    %6 = vector.broadcast %cst_5 : f32 to vector<128x60xf32>
    %7 = arith.maximumf %5, %6 : vector<128x60xf32>
    %c0_6 = arith.constant 0 : index
    %c0_7 = arith.constant 0 : index
    %8 = vector.load %arg4[%c0_6, %c0_7] : memref<60x60xf32, #tpu.memory_space<vmem>>, vector<60x60xf32>
    %cst_8 = arith.constant dense<0.000000e+00> : vector<128x60xf32>
    %9 = tpu.matmul %7, %8, %cst_8 {dimension_numbers = #tpu.dot_dimension_numbers<[1], [0], [0], [1], [0, 0, 1, 1], [], []>} : vector<128x60xf32>, vector<60x60xf32>, vector<128x60xf32> -> vector<128x60xf32>
    %c0_9 = arith.constant 0 : index
    %c0_10 = arith.constant 0 : index
    %10 = vector.load %arg5[%c0_9, %c0_10] : memref<1x60xf32, #tpu.memory_space<vmem>>, vector<1x60xf32>
    %11 = vector.broadcast %10 : vector<1x60xf32> to vector<128x60xf32>
    %12 = arith.addf %9, %11 : vector<128x60xf32>
    %cst_11 = arith.constant 0.000000e+00 : f32
    %13 = vector.broadcast %cst_11 : f32 to vector<128x60xf32>
    %14 = arith.maximumf %12, %13 : vector<128x60xf32>
    %c0_12 = arith.constant 0 : index
    %c0_13 = arith.constant 0 : index
    %15 = vector.load %arg6[%c0_12, %c0_13] : memref<60x60xf32, #tpu.memory_space<vmem>>, vector<60x60xf32>
    %cst_14 = arith.constant dense<0.000000e+00> : vector<128x60xf32>
    %16 = tpu.matmul %14, %15, %cst_14 {dimension_numbers = #tpu.dot_dimension_numbers<[1], [0], [0], [1], [0, 0, 1, 1], [], []>} : vector<128x60xf32>, vector<60x60xf32>, vector<128x60xf32> -> vector<128x60xf32>
    %c0_15 = arith.constant 0 : index
    %c0_16 = arith.constant 0 : index
    %17 = vector.load %arg7[%c0_15, %c0_16] : memref<1x60xf32, #tpu.memory_space<vmem>>, vector<1x60xf32>
    %18 = vector.broadcast %17 : vector<1x60xf32> to vector<128x60xf32>
    %19 = arith.addf %16, %18 : vector<128x60xf32>
    %cst_17 = arith.constant 0.000000e+00 : f32
    %20 = vector.broadcast %cst_17 : f32 to vector<128x60xf32>
    %21 = arith.maximumf %19, %20 : vector<128x60xf32>
    %c0_18 = arith.constant 0 : index
    %c0_19 = arith.constant 0 : index
    %22 = vector.load %arg8[%c0_18, %c0_19] : memref<60x60xf32, #tpu.memory_space<vmem>>, vector<60x60xf32>
    %cst_20 = arith.constant dense<0.000000e+00> : vector<128x60xf32>
    %23 = tpu.matmul %21, %22, %cst_20 {dimension_numbers = #tpu.dot_dimension_numbers<[1], [0], [0], [1], [0, 0, 1, 1], [], []>} : vector<128x60xf32>, vector<60x60xf32>, vector<128x60xf32> -> vector<128x60xf32>
    %c0_21 = arith.constant 0 : index
    %c0_22 = arith.constant 0 : index
    %24 = vector.load %arg9[%c0_21, %c0_22] : memref<1x60xf32, #tpu.memory_space<vmem>>, vector<1x60xf32>
    %25 = vector.broadcast %24 : vector<1x60xf32> to vector<128x60xf32>
    %26 = arith.addf %23, %25 : vector<128x60xf32>
    %cst_23 = arith.constant 0.000000e+00 : f32
    %27 = vector.broadcast %cst_23 : f32 to vector<128x60xf32>
    %28 = arith.maximumf %26, %27 : vector<128x60xf32>
    %c0_24 = arith.constant 0 : index
    %c0_25 = arith.constant 0 : index
    %29 = vector.load %arg10[%c0_24, %c0_25] : memref<10x60xf32, #tpu.memory_space<vmem>>, vector<10x60xf32>
    %cst_26 = arith.constant dense<0.000000e+00> : vector<10x128xf32>
    %30 = tpu.matmul %29, %28, %cst_26 {dimension_numbers = #tpu.dot_dimension_numbers<[1], [1], [0], [0], [0, 0, 1, 0], [], []>} : vector<10x60xf32>, vector<128x60xf32>, vector<10x128xf32> -> vector<10x128xf32>
    %c0_27 = arith.constant 0 : index
    %c0_28 = arith.constant 0 : index
    %31 = vector.load %arg11[%c0_27, %c0_28] : memref<10x1xf32, #tpu.memory_space<vmem>>, vector<10x1xf32>
    %32 = vector.broadcast %31 : vector<10x1xf32> to vector<10x128xf32>
    %33 = arith.addf %30, %32 : vector<10x128xf32>
    %cst_29 = arith.constant dense<0xFF800000> : vector<128xf32>
    %34 = vector.multi_reduction <maximumf>, %33, %cst_29 [0] : vector<10x128xf32> to vector<128xf32>
    %35 = vector.shape_cast %34 : vector<128xf32> to vector<1x128xf32>
    %36 = vector.broadcast %35 : vector<1x128xf32> to vector<10x128xf32>
    %37 = arith.subf %33, %36 : vector<10x128xf32>
    %38 = math.exp %37 : vector<10x128xf32>
    %cst_30 = arith.constant dense<0.000000e+00> : vector<128xf32>
    %39 = vector.multi_reduction <add>, %38, %cst_30 [0] : vector<10x128xf32> to vector<128xf32>
    %40 = vector.shape_cast %39 : vector<128xf32> to vector<1x128xf32>
    %41 = math.log %40 : vector<1x128xf32>
    %42 = vector.broadcast %41 : vector<1x128xf32> to vector<10x128xf32>
    %43 = arith.subf %37, %42 : vector<10x128xf32>
    %c0_31 = arith.constant 0 : index
    %c0_32 = arith.constant 0 : index
    %44 = vector.load %arg12[%c0_31, %c0_32] : memref<10x128xf32, #tpu.memory_space<vmem>>, vector<10x128xf32>
    tpu.vector_store %arg12[%c0_31, %c0_32], %43 {strides = array<i32>} : memref<10x128xf32, #tpu.memory_space<vmem>>, vector<10x128xf32>,
    return
  }
  func.func @transform_0(%arg0: i32) -> (i32, i32) {
    %c0_i32 = arith.constant 0 : i32
    %c0_i32_0 = arith.constant 0 : i32
    return %arg0, %c0_i32 : i32, i32
  }
  func.func @transform_1(%arg0: i32) -> (i32, i32) {
    %c0_i32 = arith.constant 0 : i32
    %c0_i32_0 = arith.constant 0 : i32
    %c0_i32_1 = arith.constant 0 : i32
    return %c0_i32, %c0_i32_0 : i32, i32
  }
  func.func @transform_2(%arg0: i32) -> (i32, i32) {
    %c0_i32 = arith.constant 0 : i32
    %c0_i32_0 = arith.constant 0 : i32
    %c0_i32_1 = arith.constant 0 : i32
    return %c0_i32, %c0_i32_0 : i32, i32
  }
  func.func @transform_3(%arg0: i32) -> (i32, i32) {
    %c0_i32 = arith.constant 0 : i32
    %c0_i32_0 = arith.constant 0 : i32
    %c0_i32_1 = arith.constant 0 : i32
    return %c0_i32, %c0_i32_0 : i32, i32
  }
  func.func @transform_4(%arg0: i32) -> (i32, i32) {
    %c0_i32 = arith.constant 0 : i32
    %c0_i32_0 = arith.constant 0 : i32
    %c0_i32_1 = arith.constant 0 : i32
    return %c0_i32, %c0_i32_0 : i32, i32
  }
  func.func @transform_5(%arg0: i32) -> (i32, i32) {
    %c0_i32 = arith.constant 0 : i32
    %c0_i32_0 = arith.constant 0 : i32
    %c0_i32_1 = arith.constant 0 : i32
    return %c0_i32, %c0_i32_0 : i32, i32
  }
  func.func @transform_6(%arg0: i32) -> (i32, i32) {
    %c0_i32 = arith.constant 0 : i32
    %c0_i32_0 = arith.constant 0 : i32
    %c0_i32_1 = arith.constant 0 : i32
    return %c0_i32, %c0_i32_0 : i32, i32
  }
  func.func @transform_7(%arg0: i32) -> (i32, i32) {
    %c0_i32 = arith.constant 0 : i32
    %c0_i32_0 = arith.constant 0 : i32
    %c0_i32_1 = arith.constant 0 : i32
    return %c0_i32, %c0_i32_0 : i32, i32
  }
  func.func @transform_8(%arg0: i32) -> (i32, i32) {
    %c0_i32 = arith.constant 0 : i32
    %c0_i32_0 = arith.constant 0 : i32
    %c0_i32_1 = arith.constant 0 : i32
    return %c0_i32, %c0_i32_0 : i32, i32
  }
  func.func @transform_9(%arg0: i32) -> (i32, i32) {
    %c0_i32 = arith.constant 0 : i32
    %c0_i32_0 = arith.constant 0 : i32
    %c0_i32_1 = arith.constant 0 : i32
    return %c0_i32, %c0_i32_0 : i32, i32
  }
  func.func @transform_10(%arg0: i32) -> (i32, i32) {
    %c0_i32 = arith.constant 0 : i32
    %c0_i32_0 = arith.constant 0 : i32
    %c0_i32_1 = arith.constant 0 : i32
    return %c0_i32, %c0_i32_0 : i32, i32
  }
  func.func @transform_11(%arg0: i32) -> (i32, i32) {
    %c0_i32 = arith.constant 0 : i32
    %c0_i32_0 = arith.constant 0 : i32
    return %c0_i32, %arg0 : i32, i32
  }
}

</mosaic_0001>

<llo_original>
// kernel: tpu_custom_call.1
$region0: #{tpu_custom_call.1}
  #allocation0 [shape = 'u32[]', space=smem, size = 0x4, offset = 0x4, fixed_abs, tag = 'smem constant byte address 0x4 - core index']
  #allocation1 [shape = 'u32[144,128]{1,0:T(1,128)}', space=vmem, size = 0x12000, scoped, tag = 'internal scratch']
  %s0 = inlined_call_operand.vmem [shape: f32[200,20], index: 0, kind: input, shape index: {}]
  %s1 = inlined_call_operand.vmem [shape: f32[20,60], index: 1, kind: input, shape index: {}]
  %s2 = inlined_call_operand.vmem [shape: f32[1,60], index: 2, kind: input, shape index: {}]
  %s3 = inlined_call_operand.vmem [shape: f32[60,60], index: 3, kind: input, shape index: {}]
  %s4 = inlined_call_operand.vmem [shape: f32[1,60], index: 4, kind: input, shape index: {}]
  %s5 = inlined_call_operand.vmem [shape: f32[60,60], index: 5, kind: input, shape index: {}]
  %s6 = inlined_call_operand.vmem [shape: f32[1,60], index: 6, kind: input, shape index: {}]
  %s7 = inlined_call_operand.vmem [shape: f32[60,60], index: 7, kind: input, shape index: {}]
  %s8 = inlined_call_operand.vmem [shape: f32[1,60], index: 8, kind: input, shape index: {}]
  %s9 = inlined_call_operand.vmem [shape: f32[10,60], index: 9, kind: input, shape index: {}]
  %s10 = inlined_call_operand.vmem [shape: f32[10,1], index: 10, kind: input, shape index: {}]
  %s11 = inlined_call_operand.hbm [shape: f32[10,200], index: 11, kind: output, shape index: {}]
  %s12 = sld [smem:[#allocation0]]
  $region77: #{tpu_custom_call.1} parent=0
    _
  %s14 = ssub.s32 1, %s12
  %s15 = scalar_select 0, %s14, %s12
  $region1: #{tpu_custom_call.1} parent=0
    #allocation2 [shape = 'u8[16384]{0}', space=vmem, size = 0x4000, scoped, tag = 'output window, operand 0']
    #allocation3 [shape = 's32[2]{0}', space=sflag, size = 0x8, scoped, tag = 'scoped memory for tpu_custom_call.1']
    %16 = vsyncpa [#allocation3], 0
    %s17 = scalar_lea.sflag [#allocation3], 1
    %18 = vsyncpa %s17, 0
    loop: start=0, step=1, limit=4
    $region2: #{tpu_custom_call.1} parent=1 // loop_pre_header
      _
    $region3: #{tpu_custom_call.1} parent=1 // loop_header
      %s20 = sphi 0, %s24
      %p21 = scmp.ge.s32.totalorder %s20, 4
      %s30 = sphi 0, %s32
      %s33 = sphi 0, %s30
      %s34 = sphi 0, %s33
      %s50 = sphi 0, %s34
      %s54 = sphi 0, %s54
      %s56 = sphi 0, %s54
      %s57 = sphi 0, %s56
      %s71 = sphi 0, %s57
      %s75 = sphi 0, %s75
      %s77 = sphi 0, %s75
      %s78 = sphi 0, %s77
      %s92 = sphi 0, %s78
      %s96 = sphi 0, %s96
      %s98 = sphi 0, %s96
      %s99 = sphi 0, %s98
      %s113 = sphi 0, %s99
      %s117 = sphi 0, %s117
      %s119 = sphi 0, %s117
      %s120 = sphi 0, %s119
      %s134 = sphi 0, %s120
      %s138 = sphi 0, %s138
      %s140 = sphi 0, %s138
      %s141 = sphi 0, %s140
      %s155 = sphi 0, %s141
      %s159 = sphi 0, %s159
      %s161 = sphi 0, %s159
      %s162 = sphi 0, %s161
      %s176 = sphi 0, %s162
      %s180 = sphi 0, %s180
      %s182 = sphi 0, %s180
      %s183 = sphi 0, %s182
      %s197 = sphi 0, %s183
      %s201 = sphi 0, %s201
      %s203 = sphi 0, %s201
      %s204 = sphi 0, %s203
      %s218 = sphi 0, %s204
      %s222 = sphi 0, %s222
      %s224 = sphi 0, %s222
      %s225 = sphi 0, %s224
      %s239 = sphi 0, %s225
      %s243 = sphi 0, %s243
      %s245 = sphi 0, %s243
      %s246 = sphi 0, %s245
      %s260 = sphi 0, %s246
      %s266 = sphi 0, %s268
      %s269 = sphi 0, %s266
      %s270 = sphi 0, %s269
      %s286 = sphi 0, %s270
    $region4: #{tpu_custom_call.1} parent=1 // loop_header_branch
      %23 = sbr.rel (%p21) target = $region8
    $region5: #{tpu_custom_call.1} parent=1 // loop_body
      %s25 = ssub.s32 %s20, 1
      %s26 = ssub.s32 %s20, 2
      %s27 = sadd.s32 %s20, 1
      %s28 = ssub.s32 %s20, %s27
      %p29 = scmp.eq.s32.totalorder %s28, 0
      %s31 = sadd.s32 %s30, 1
      %s32 = scalar_select %p29, %s30, %s31
      %p35 = pneg %p29
      %p36 = scmp.eq.s32.totalorder %s20, 1
      %p37 = por %p35, %p36
      %p38 = scmp.ne.s32.totalorder %s30, %s33
      %p39 = scmp.eq.s32.totalorder %s20, 0
      %p40 = por %p38, %p39
      %p41 = scmp.ne.s32.totalorder %s30, %s33
      %p42 = scmp.eq.s32.totalorder %s25, 1
      %p43 = por %p41, %p42
      %p44 = scmp.ne.s32.totalorder %s33, %s34
      %p45 = scmp.eq.s32.totalorder %s25, 0
      %p46 = por %p44, %p45
      %p47 = scmp.ne.s32.totalorder %s33, %s34
      %p48 = scmp.eq.s32.totalorder %s26, 1
      %p49 = por %p47, %p48
      %p51 = scmp.ne.s32.totalorder %s34, %s50
      %p52 = scmp.eq.s32.totalorder %s26, 0
      %p53 = por %p51, %p52
      %s55 = sadd.s32 %s54, 1
      %p58 = scmp.eq.s32.totalorder %s20, 1
      %p59 = scmp.ne.s32.totalorder %s54, %s56
      %p60 = scmp.eq.s32.totalorder %s20, 0
      %p61 = por %p59, %p60
      %p62 = scmp.ne.s32.totalorder %s54, %s56
      %p63 = scmp.eq.s32.totalorder %s25, 1
      %p64 = por %p62, %p63
      %p65 = scmp.ne.s32.totalorder %s56, %s57
      %p66 = scmp.eq.s32.totalorder %s25, 0
      %p67 = por %p65, %p66
      %p68 = scmp.ne.s32.totalorder %s56, %s57
      %p69 = scmp.eq.s32.totalorder %s26, 1
      %p70 = por %p68, %p69
      %p72 = scmp.ne.s32.totalorder %s57, %s71
      %p73 = scmp.eq.s32.totalorder %s26, 0
      %p74 = por %p72, %p73
      %s76 = sadd.s32 %s75, 1
      %p79 = scmp.eq.s32.totalorder %s20, 1
      %p80 = scmp.ne.s32.totalorder %s75, %s77
      %p81 = scmp.eq.s32.totalorder %s20, 0
      %p82 = por %p80, %p81
      %p83 = scmp.ne.s32.totalorder %s75, %s77
      %p84 = scmp.eq.s32.totalorder %s25, 1
      %p85 = por %p83, %p84
      %p86 = scmp.ne.s32.totalorder %s77, %s78
      %p87 = scmp.eq.s32.totalorder %s25, 0
      %p88 = por %p86, %p87
      %p89 = scmp.ne.s32.totalorder %s77, %s78
      %p90 = scmp.eq.s32.totalorder %s26, 1
      %p91 = por %p89, %p90
      %p93 = scmp.ne.s32.totalorder %s78, %s92
      %p94 = scmp.eq.s32.totalorder %s26, 0
      %p95 = por %p93, %p94
      %s97 = sadd.s32 %s96, 1
      %p100 = scmp.eq.s32.totalorder %s20, 1
      %p101 = scmp.ne.s32.totalorder %s96, %s98
      %p102 = scmp.eq.s32.totalorder %s20, 0
      %p103 = por %p101, %p102
      %p104 = scmp.ne.s32.totalorder %s96, %s98
      %p105 = scmp.eq.s32.totalorder %s25, 1
      %p106 = por %p104, %p105
      %p107 = scmp.ne.s32.totalorder %s98, %s99
      %p108 = scmp.eq.s32.totalorder %s25, 0
      %p109 = por %p107, %p108
      %p110 = scmp.ne.s32.totalorder %s98, %s99
      %p111 = scmp.eq.s32.totalorder %s26, 1
      %p112 = por %p110, %p111
      %p114 = scmp.ne.s32.totalorder %s99, %s113
      %p115 = scmp.eq.s32.totalorder %s26, 0
      %p116 = por %p114, %p115
      %s118 = sadd.s32 %s117, 1
      %p121 = scmp.eq.s32.totalorder %s20, 1
      %p122 = scmp.ne.s32.totalorder %s117, %s119
      %p123 = scmp.eq.s32.totalorder %s20, 0
      %p124 = por %p122, %p123
      %p125 = scmp.ne.s32.totalorder %s117, %s119
      %p126 = scmp.eq.s32.totalorder %s25, 1
      %p127 = por %p125, %p126
      %p128 = scmp.ne.s32.totalorder %s119, %s120
      %p129 = scmp.eq.s32.totalorder %s25, 0
      %p130 = por %p128, %p129
      %p131 = scmp.ne.s32.totalorder %s119, %s120
      %p132 = scmp.eq.s32.totalorder %s26, 1
      %p133 = por %p131, %p132
      %p135 = scmp.ne.s32.totalorder %s120, %s134
      %p136 = scmp.eq.s32.totalorder %s26, 0
      %p137 = por %p135, %p136
      %s139 = sadd.s32 %s138, 1
      %p142 = scmp.eq.s32.totalorder %s20, 1
      %p143 = scmp.ne.s32.totalorder %s138, %s140
      %p144 = scmp.eq.s32.totalorder %s20, 0
      %p145 = por %p143, %p144
      %p146 = scmp.ne.s32.totalorder %s138, %s140
      %p147 = scmp.eq.s32.totalorder %s25, 1
      %p148 = por %p146, %p147
      %p149 = scmp.ne.s32.totalorder %s140, %s141
      %p150 = scmp.eq.s32.totalorder %s25, 0
      %p151 = por %p149, %p150
      %p152 = scmp.ne.s32.totalorder %s140, %s141
      %p153 = scmp.eq.s32.totalorder %s26, 1
      %p154 = por %p152, %p153
      %p156 = scmp.ne.s32.totalorder %s141, %s155
      %p157 = scmp.eq.s32.totalorder %s26, 0
      %p158 = por %p156, %p157
      %s160 = sadd.s32 %s159, 1
      %p163 = scmp.eq.s32.totalorder %s20, 1
      %p164 = scmp.ne.s32.totalorder %s159, %s161
      %p165 = scmp.eq.s32.totalorder %s20, 0
      %p166 = por %p164, %p165
      %p167 = scmp.ne.s32.totalorder %s159, %s161
      %p168 = scmp.eq.s32.totalorder %s25, 1
      %p169 = por %p167, %p168
      %p170 = scmp.ne.s32.totalorder %s161, %s162
      %p171 = scmp.eq.s32.totalorder %s25, 0
      %p172 = por %p170, %p171
      %p173 = scmp.ne.s32.totalorder %s161, %s162
      %p174 = scmp.eq.s32.totalorder %s26, 1
      %p175 = por %p173, %p174
      %p177 = scmp.ne.s32.totalorder %s162, %s176
      %p178 = scmp.eq.s32.totalorder %s26, 0
      %p179 = por %p177, %p178
      %s181 = sadd.s32 %s180, 1
      %p184 = scmp.eq.s32.totalorder %s20, 1
      %p185 = scmp.ne.s32.totalorder %s180, %s182
      %p186 = scmp.eq.s32.totalorder %s20, 0
      %p187 = por %p185, %p186
      %p188 = scmp.ne.s32.totalorder %s180, %s182
      %p189 = scmp.eq.s32.totalorder %s25, 1
      %p190 = por %p188, %p189
      %p191 = scmp.ne.s32.totalorder %s182, %s183
      %p192 = scmp.eq.s32.totalorder %s25, 0
      %p193 = por %p191, %p192
      %p194 = scmp.ne.s32.totalorder %s182, %s183
      %p195 = scmp.eq.s32.totalorder %s26, 1
      %p196 = por %p194, %p195
      %p198 = scmp.ne.s32.totalorder %s183, %s197
      %p199 = scmp.eq.s32.totalorder %s26, 0
      %p200 = por %p198, %p199
      %s202 = sadd.s32 %s201, 1
      %p205 = scmp.eq.s32.totalorder %s20, 1
      %p206 = scmp.ne.s32.totalorder %s201, %s203
      %p207 = scmp.eq.s32.totalorder %s20, 0
      %p208 = por %p206, %p207
      %p209 = scmp.ne.s32.totalorder %s201, %s203
      %p210 = scmp.eq.s32.totalorder %s25, 1
      %p211 = por %p209, %p210
      %p212 = scmp.ne.s32.totalorder %s203, %s204
      %p213 = scmp.eq.s32.totalorder %s25, 0
      %p214 = por %p212, %p213
      %p215 = scmp.ne.s32.totalorder %s203, %s204
      %p216 = scmp.eq.s32.totalorder %s26, 1
      %p217 = por %p215, %p216
      %p219 = scmp.ne.s32.totalorder %s204, %s218
      %p220 = scmp.eq.s32.totalorder %s26, 0
      %p221 = por %p219, %p220
      %s223 = sadd.s32 %s222, 1
      %p226 = scmp.eq.s32.totalorder %s20, 1
      %p227 = scmp.ne.s32.totalorder %s222, %s224
      %p228 = scmp.eq.s32.totalorder %s20, 0
      %p229 = por %p227, %p228
      %p230 = scmp.ne.s32.totalorder %s222, %s224
      %p231 = scmp.eq.s32.totalorder %s25, 1
      %p232 = por %p230, %p231
      %p233 = scmp.ne.s32.totalorder %s224, %s225
      %p234 = scmp.eq.s32.totalorder %s25, 0
      %p235 = por %p233, %p234
      %p236 = scmp.ne.s32.totalorder %s224, %s225
      %p237 = scmp.eq.s32.totalorder %s26, 1
      %p238 = por %p236, %p237
      %p240 = scmp.ne.s32.totalorder %s225, %s239
      %p241 = scmp.eq.s32.totalorder %s26, 0
      %p242 = por %p240, %p241
      %s244 = sadd.s32 %s243, 1
      %p247 = scmp.eq.s32.totalorder %s20, 1
      %p248 = scmp.ne.s32.totalorder %s243, %s245
      %p249 = scmp.eq.s32.totalorder %s20, 0
      %p250 = por %p248, %p249
      %p251 = scmp.ne.s32.totalorder %s243, %s245
      %p252 = scmp.eq.s32.totalorder %s25, 1
      %p253 = por %p251, %p252
      %p254 = scmp.ne.s32.totalorder %s245, %s246
      %p255 = scmp.eq.s32.totalorder %s25, 0
      %p256 = por %p254, %p255
      %p257 = scmp.ne.s32.totalorder %s245, %s246
      %p258 = scmp.eq.s32.totalorder %s26, 1
      %p259 = por %p257, %p258
      %p261 = scmp.ne.s32.totalorder %s246, %s260
      %p262 = scmp.eq.s32.totalorder %s26, 0
      %p263 = por %p261, %p262
      %s264 = ssub.s32 %s20, %s27
      %p265 = scmp.eq.s32.totalorder %s264, 0
      %s267 = sadd.s32 %s266, 1
      %s268 = scalar_select %p265, %s266, %s267
      %p271 = pneg %p265
      %p272 = scmp.eq.s32.totalorder %s20, 1
      %p273 = por %p271, %p272
      %p274 = scmp.ne.s32.totalorder %s266, %s269
      %p275 = scmp.eq.s32.totalorder %s20, 0
      %p276 = por %p274, %p275
      %p277 = scmp.ne.s32.totalorder %s266, %s269
      %p278 = scmp.eq.s32.totalorder %s25, 1
      %p279 = por %p277, %p278
      %p280 = scmp.ne.s32.totalorder %s269, %s270
      %p281 = scmp.eq.s32.totalorder %s25, 0
      %p282 = por %p280, %p281
      %p283 = scmp.ne.s32.totalorder %s269, %s270
      %p284 = scmp.eq.s32.totalorder %s26, 1
      %p285 = por %p283, %p284
      %p287 = scmp.ne.s32.totalorder %s270, %s286
      %p288 = scmp.eq.s32.totalorder %s26, 0
      %p289 = por %p287, %p288
      %p290 = scmp.le.s32.totalorder 1, %s20
      %p291 = scmp.lt.s32.totalorder %s20, 3
      %p292 = pnand %p290, %p291
      %p293 = pneg %p292
      // Predicated region
      $region9: #{tpu_custom_call.1} parent=5 // pred_check
        _
      $region10: #{tpu_custom_call.1} parent=5 // pred_check_branch
        %295 = sbr.rel (%p292) target = $region12
      $region11: #{tpu_custom_call.1} parent=5 // pred_region
        %s296 = ssub.s32 %s20, 1
        // Predicated region
        $region13: #{tpu_custom_call.1} parent=11 // pred_check
          %p297 = pneg %p67
        $region14: #{tpu_custom_call.1} parent=11 // pred_check_branch
          %299 = sbr.rel (%p297) target = $region16
        $region15: #{tpu_custom_call.1} parent=11 // pred_region
          _
        $region16: #{tpu_custom_call.1} parent=11 // pred_fallthru
          _
        // Predicated region
        $region17: #{tpu_custom_call.1} parent=11 // pred_check
          %p300 = pneg %p88
        $region18: #{tpu_custom_call.1} parent=11 // pred_check_branch
          %302 = sbr.rel (%p300) target = $region20
        $region19: #{tpu_custom_call.1} parent=11 // pred_region
          _
        $region20: #{tpu_custom_call.1} parent=11 // pred_fallthru
          _
        // Predicated region
        $region21: #{tpu_custom_call.1} parent=11 // pred_check
          %p303 = pneg %p109
        $region22: #{tpu_custom_call.1} parent=11 // pred_check_branch
          %305 = sbr.rel (%p303) target = $region24
        $region23: #{tpu_custom_call.1} parent=11 // pred_region
          _
        $region24: #{tpu_custom_call.1} parent=11 // pred_fallthru
          _
        // Predicated region
        $region25: #{tpu_custom_call.1} parent=11 // pred_check
          %p306 = pneg %p130
        $region26: #{tpu_custom_call.1} parent=11 // pred_check_branch
          %308 = sbr.rel (%p306) target = $region28
        $region27: #{tpu_custom_call.1} parent=11 // pred_region
          _
        $region28: #{tpu_custom_call.1} parent=11 // pred_fallthru
          _
        // Predicated region
        $region29: #{tpu_custom_call.1} parent=11 // pred_check
          %p309 = pneg %p151
        $region30: #{tpu_custom_call.1} parent=11 // pred_check_branch
          %311 = sbr.rel (%p309) target = $region32
        $region31: #{tpu_custom_call.1} parent=11 // pred_region
          _
        $region32: #{tpu_custom_call.1} parent=11 // pred_fallthru
          _
        // Predicated region
        $region33: #{tpu_custom_call.1} parent=11 // pred_check
          %p312 = pneg %p172
        $region34: #{tpu_custom_call.1} parent=11 // pred_check_branch
          %314 = sbr.rel (%p312) target = $region36
        $region35: #{tpu_custom_call.1} parent=11 // pred_region
          _
        $region36: #{tpu_custom_call.1} parent=11 // pred_fallthru
          _
        // Predicated region
        $region37: #{tpu_custom_call.1} parent=11 // pred_check
          %p315 = pneg %p193
        $region38: #{tpu_custom_call.1} parent=11 // pred_check_branch
          %317 = sbr.rel (%p315) target = $region40
        $region39: #{tpu_custom_call.1} parent=11 // pred_region
          _
        $region40: #{tpu_custom_call.1} parent=11 // pred_fallthru
          _
        // Predicated region
        $region41: #{tpu_custom_call.1} parent=11 // pred_check
          %p318 = pneg %p214
        $region42: #{tpu_custom_call.1} parent=11 // pred_check_branch
          %320 = sbr.rel (%p318) target = $region44
        $region43: #{tpu_custom_call.1} parent=11 // pred_region
          _
        $region44: #{tpu_custom_call.1} parent=11 // pred_fallthru
          _
        // Predicated region
        $region45: #{tpu_custom_call.1} parent=11 // pred_check
          %p321 = pneg %p235
        $region46: #{tpu_custom_call.1} parent=11 // pred_check_branch
          %323 = sbr.rel (%p321) target = $region48
        $region47: #{tpu_custom_call.1} parent=11 // pred_region
          _
        $region48: #{tpu_custom_call.1} parent=11 // pred_fallthru
          _
        // Predicated region
        $region49: #{tpu_custom_call.1} parent=11 // pred_check
          %p324 = pneg %p256
        $region50: #{tpu_custom_call.1} parent=11 // pred_check_branch
          %326 = sbr.rel (%p324) target = $region52
        $region51: #{tpu_custom_call.1} parent=11 // pred_region
          _
        $region52: #{tpu_custom_call.1} parent=11 // pred_fallthru
          _
      $region12: #{tpu_custom_call.1} parent=5 // pred_fallthru
        _
      %p327 = scmp.lt.s32.totalorder %s20, 2
      // Predicated region
      $region53: #{tpu_custom_call.1} parent=5 // pred_check
        %p328 = pneg %p327
      $region54: #{tpu_custom_call.1} parent=5 // pred_check_branch
        %330 = sbr.rel (%p328) target = $region56
      $region55: #{tpu_custom_call.1} parent=5 // pred_region
        // Predicated region
        $region57: #{tpu_custom_call.1} parent=55 // pred_check
          %p331 = pneg %p40
        $region58: #{tpu_custom_call.1} parent=55 // pred_check_branch
          %333 = sbr.rel (%p331) target = $region60
        $region59: #{tpu_custom_call.1} parent=55 // pred_region
          %s334 = smul.u32 16, %s20
          %s335 = ssub.s32 25, %s334
          %p336 = scmp.lt.s32.totalorder %s335, 16
          %s337 = scalar_select %p336, %s335, 16
          %s338 = smul.u32 128, %s337
          %p339 = scmp.lt.s32.totalorder %s334, 24
          %s340 = scalar_select %p339, %s334, 24
          %s341 = smul.addr %s340, 8
          %s342 = scalar_lea.vmem %s0, %s341
          %s343 = smul.u32 16, %s20
          %s344 = ssub.s32 25, %s343
          %p345 = scmp.lt.s32.totalorder %s344, 16
          %s346 = scalar_select %p345, %s344, 16
          %s347 = smul.u32 128, %s346
        $region60: #{tpu_custom_call.1} parent=55 // pred_fallthru
          _
      $region56: #{tpu_custom_call.1} parent=5 // pred_fallthru
        _
      %p348 = scmp.le.s32.totalorder 1, %s20
      %p349 = scmp.lt.s32.totalorder %s20, 3
      %p350 = pnand %p348, %p349
      %p351 = pneg %p350
      // Predicated region
      $region61: #{tpu_custom_call.1} parent=5 // pred_check
        _
      $region62: #{tpu_custom_call.1} parent=5 // pred_check_branch
        %353 = sbr.rel (%p350) target = $region64
      $region63: #{tpu_custom_call.1} parent=5 // pred_region
        %s354 = ssub.s32 %s20, 1
        %s355 = smul.u32 16, %s25
        %s356 = ssub.s32 25, %s355
        %p357 = scmp.lt.s32.totalorder %s356, 16
        %s358 = scalar_select %p357, %s356, 16
        %s359 = smul.u32 128, %s358
        %p360 = scmp.lt.s32.totalorder %s355, 24
        %s361 = scalar_select %p360, %s355, 24
        %s362 = smul.addr %s361, 8
        %s363 = scalar_lea.vmem %s0, %s362
        %p364 = pneg %p46
        %p365 = pneg %p43
        %p366 = pneg %p67
        %p367 = pneg %p64
        %p368 = pneg %p88
        %p369 = pneg %p85
        %p370 = pneg %p109
        %p371 = pneg %p106
        %p372 = pneg %p130
        %p373 = pneg %p127
        %p374 = pneg %p151
        %p375 = pneg %p148
        %p376 = pneg %p172
        %p377 = pneg %p169
        %p378 = pneg %p193
        %p379 = pneg %p190
        %p380 = pneg %p214
        %p381 = pneg %p211
        %p382 = pneg %p235
        %p383 = pneg %p232
        %p384 = pneg %p256
        %p385 = pneg %p253
        %p386 = pneg %p282
        %p387 = pneg %p279
        %s388 = sand.u32 %s269, 1
        %s389 = scalar_lea.sflag [#allocation3], %s388
        %s390 = sand.u32 %s269, 1
        %s391 = smul.addr %s390, 16
        %s392 = scalar_lea.vmem [#allocation2], %s391
        %s393 = smul.u32 16, %s25
        %s394 = ssub.s32 25, %s393
        %p395 = scmp.lt.s32.totalorder %s394, 16
        %s396 = scalar_select %p395, %s394, 16
        %s397 = smul.u32 128, %s396
        %p398 = scmp.lt.s32.totalorder %s393, 24
        %s399 = scalar_select %p398, %s393, 24
        %s400 = smul.addr %s399, 8
        %s401 = scalar_lea.vmem %s0, %s400
        %s402 = smul.u32 16, %s25
        %s403 = ssub.s32 25, %s402
        %p404 = scmp.lt.s32.totalorder %s403, 16
        %s405 = scalar_select %p404, %s403, 16
        %s406 = smul.u32 128, %s405
        %v407 = vld [vmem:[%s401] sm:$0xff]
        %v408 = vld [vmem:[%s401 + $0x8] sm:$0xff]
        %v409 = vld [vmem:[%s401 + $0x10] sm:$0xff]
        %v410 = vld [vmem:[%s401 + $0x18] sm:$0xff]
        %v411 = vld [vmem:[%s401 + $0x20] sm:$0xff]
        %v412 = vld [vmem:[%s401 + $0x28] sm:$0xff]
        %v413 = vld [vmem:[%s401 + $0x30] sm:$0xff]
        %v414 = vld [vmem:[%s401 + $0x38] sm:$0xff]
        %v415 = vld [vmem:[%s401 + $0x40] sm:$0xff]
        %v416 = vld [vmem:[%s401 + $0x48] sm:$0xff]
        %v417 = vld [vmem:[%s401 + $0x50] sm:$0xff]
        %v418 = vld [vmem:[%s401 + $0x58] sm:$0xff]
        %v419 = vld [vmem:[%s401 + $0x60] sm:$0xff]
        %v420 = vld [vmem:[%s401 + $0x68] sm:$0xff]
        %v421 = vld [vmem:[%s401 + $0x70] sm:$0xff]
        %v422 = vld [vmem:[%s401 + $0x78] sm:$0xff]
        %v423 = vld [vmem:[%s1] sm:$0xff]
        %v424 = vld [vmem:[%s1 + $0x8] sm:$0xff]
        %v425 = vld [vmem:[%s1 + $0x10] sm:$0xf]
        %v426 = vld [vmem:[%s2] sm:$0x1]
        %v428 = vlaneseq
        %v429 = vshrl.u32 %v428, 7
        %v430 = vsub.s32 0, %v429
        %v431 = vrot.slane %v426, %v430
        %vm433 = vcmask 162816
        %v435 = vsel %vm433, %v407, 0
        %v438 = vsel %vm433, %v408, 0
        %v441 = vsel %vm433, %v409, 0
        %v444 = vsel %vm433, %v410, 0
        %v447 = vsel %vm433, %v411, 0
        %v450 = vsel %vm433, %v412, 0
        %v453 = vsel %vm433, %v413, 0
        %v456 = vsel %vm433, %v414, 0
        %v459 = vsel %vm433, %v415, 0
        %v462 = vsel %vm433, %v416, 0
        %v465 = vsel %vm433, %v417, 0
        %v468 = vsel %vm433, %v418, 0
        %v471 = vsel %vm433, %v419, 0
        %v474 = vsel %vm433, %v420, 0
        %v477 = vsel %vm433, %v421, 0
        %v480 = vsel %vm433, %v422, 0
        %vm482 = vcmask 1043456
        %v484 = vsel %vm482, %v425, 0
        %486 = vmatprep.subr.mxu0 0.0
        %487 = vmatpush1.msra.mxu0 %v423
        %488 = vmatprep.subr.mxu0 0.0
        %489 = vmatpush1.msra.mxu0 %v424
        %490 = vmatprep.subr.mxu0 0.0
        %491 = vmatpush1.msra.mxu0 %v484
        %492 = vmatprep.subr.mxu0 0.0
        %493 = vmatpush1.msra.mxu0 0.0
        %494 = vmatprep.subr.mxu0 0.0
        %495 = vmatpush1.msra.mxu0 0.0
        %496 = vmatprep.subr.mxu0 0.0
        %497 = vmatpush1.msra.mxu0 0.0
        %498 = vmatprep.subr.mxu0 0.0
        %499 = vmatpush1.msra.mxu0 0.0
        %500 = vmatprep.subr.mxu0 0.0
        %501 = vmatpush1.msra.mxu0 0.0
        %502 = vmatprep.subr.mxu0 0.0
        %503 = vmatpush1.msra.mxu0 0.0
        %504 = vmatprep.subr.mxu0 0.0
        %505 = vmatpush1.msra.mxu0 0.0
        %506 = vmatprep.subr.mxu0 0.0
        %507 = vmatpush1.msra.mxu0 0.0
        %508 = vmatprep.subr.mxu0 0.0
        %509 = vmatpush1.msra.mxu0 0.0
        %510 = vmatprep.subr.mxu0 0.0
        %511 = vmatpush1.msra.mxu0 0.0
        %512 = vmatprep.subr.mxu0 0.0
        %513 = vmatpush1.msra.mxu0 0.0
        %514 = vmatprep.subr.mxu0 0.0
        %515 = vmatpush1.msra.mxu0 0.0
        %516 = vmatprep.subr.mxu0 0.0
        %517 = vmatpush1.msra.mxu0 0.0
        %518 = vmatprep.subr.mxu0 0.0
        %519 = vmatpush1.msra.mxu0 0.0
        %520 = vmatprep.subr.mxu0 0.0
        %521 = vmatpush1.msra.mxu0 0.0
        %522 = vmatprep.subr.mxu0 0.0
        %523 = vmatpush1.msra.mxu0 0.0
        %524 = vmatprep.subr.mxu0 0.0
        %525 = vmatpush1.msra.mxu0 0.0
        %526 = vmatprep.subr.mxu0 0.0
        %527 = vmatpush1.msra.mxu0 0.0
        %528 = vmatprep.subr.mxu0 0.0
        %529 = vmatpush1.msra.mxu0 0.0
        %530 = vmatprep.subr.mxu0 0.0
        %531 = vmatpush1.msra.mxu0 0.0
        %532 = vmatprep.subr.mxu0 0.0
        %533 = vmatpush1.msra.mxu0 0.0
        %534 = vmatprep.subr.mxu0 0.0
        %535 = vmatpush1.msra.mxu0 0.0
        %536 = vmatprep.subr.mxu0 0.0
        %537 = vmatpush1.msra.mxu0 0.0
        %538 = vmatprep.subr.mxu0 0.0
        %539 = vmatpush1.msra.mxu0 0.0
        %540 = vmatprep.subr.mxu0 0.0
        %541 = vmatpush1.msra.mxu0 0.0
        %542 = vmatprep.subr.mxu0 0.0
        %543 = vmatpush1.msra.mxu0 0.0
        %544 = vmatprep.subr.mxu0 0.0
        %545 = vmatpush1.msra.mxu0 0.0
        %546 = vmatprep.subr.mxu0 0.0
        %547 = vmatpush1.msra.mxu0 0.0
        %548 = vmatprep.subr.mxu0 0.0
        %549 = vmatpush1.msra.mxu0 0.0
        %550 = vmatprep.mubr.f32.mxu0 0.0
        %551 = vmatmul.mubr.f32.gmra.mrb[0].mxu0 %v435
        %v552 = vpop.f32.mrb[0].mxu0
        %v553 = vadd.f32 %v431, %v552
        %v554 = vpop.f32.mrb[0].mxu0
        %555 = vmatprep.mubr.f32.mxu0 0.0
        %556 = vmatmul.mubr.f32.gmra.mrb[0].mxu0 %v438
        %v557 = vpop.f32.mrb[0].mxu0
        %v558 = vadd.f32 %v431, %v557
        %v559 = vpop.f32.mrb[0].mxu0
        %560 = vmatprep.mubr.f32.mxu0 0.0
        %561 = vmatmul.mubr.f32.gmra.mrb[0].mxu0 %v441
        %v562 = vpop.f32.mrb[0].mxu0
        %v563 = vadd.f32 %v431, %v562
        %v564 = vpop.f32.mrb[0].mxu0
        %565 = vmatprep.mubr.f32.mxu0 0.0
        %566 = vmatmul.mubr.f32.gmra.mrb[0].mxu0 %v444
        %v567 = vpop.f32.mrb[0].mxu0
        %v568 = vadd.f32 %v431, %v567
        %v569 = vpop.f32.mrb[0].mxu0
        %570 = vmatprep.mubr.f32.mxu0 0.0
        %571 = vmatmul.mubr.f32.gmra.mrb[0].mxu0 %v447
        %v572 = vpop.f32.mrb[0].mxu0
        %v573 = vadd.f32 %v431, %v572
        %v574 = vpop.f32.mrb[0].mxu0
        %575 = vmatprep.mubr.f32.mxu0 0.0
        %576 = vmatmul.mubr.f32.gmra.mrb[0].mxu0 %v450
        %v577 = vpop.f32.mrb[0].mxu0
        %v578 = vadd.f32 %v431, %v577
        %v579 = vpop.f32.mrb[0].mxu0
        %580 = vmatprep.mubr.f32.mxu0 0.0
        %581 = vmatmul.mubr.f32.gmra.mrb[0].mxu0 %v453
        %v582 = vpop.f32.mrb[0].mxu0
        %v583 = vadd.f32 %v431, %v582
        %v584 = vpop.f32.mrb[0].mxu0
        %585 = vmatprep.mubr.f32.mxu0 0.0
        %586 = vmatmul.mubr.f32.gmra.mrb[0].mxu0 %v456
        %v587 = vpop.f32.mrb[0].mxu0
        %v588 = vadd.f32 %v431, %v587
        %v589 = vpop.f32.mrb[0].mxu0
        %590 = vmatprep.mubr.f32.mxu0 0.0
        %591 = vmatmul.mubr.f32.gmra.mrb[0].mxu0 %v459
        %v592 = vpop.f32.mrb[0].mxu0
        %v593 = vadd.f32 %v431, %v592
        %v594 = vpop.f32.mrb[0].mxu0
        %595 = vmatprep.mubr.f32.mxu0 0.0
        %596 = vmatmul.mubr.f32.gmra.mrb[0].mxu0 %v462
        %v597 = vpop.f32.mrb[0].mxu0
        %v598 = vadd.f32 %v431, %v597
        %v599 = vpop.f32.mrb[0].mxu0
        %600 = vmatprep.mubr.f32.mxu0 0.0
        %601 = vmatmul.mubr.f32.gmra.mrb[0].mxu0 %v465
        %v602 = vpop.f32.mrb[0].mxu0
        %v603 = vadd.f32 %v431, %v602
        %v604 = vpop.f32.mrb[0].mxu0
        %605 = vmatprep.mubr.f32.mxu0 0.0
        %606 = vmatmul.mubr.f32.gmra.mrb[0].mxu0 %v468
        %v607 = vpop.f32.mrb[0].mxu0
        %v608 = vadd.f32 %v431, %v607
        %v609 = vpop.f32.mrb[0].mxu0
        %610 = vmatprep.mubr.f32.mxu0 0.0
        %611 = vmatmul.mubr.f32.gmra.mrb[0].mxu0 %v471
        %v612 = vpop.f32.mrb[0].mxu0
        %v613 = vadd.f32 %v431, %v612
        %v614 = vpop.f32.mrb[0].mxu0
        %615 = vmatprep.mubr.f32.mxu0 0.0
        %616 = vmatmul.mubr.f32.gmra.mrb[0].mxu0 %v474
        %v617 = vpop.f32.mrb[0].mxu0
        %v618 = vadd.f32 %v431, %v617
        %v619 = vpop.f32.mrb[0].mxu0
        %620 = vmatprep.mubr.f32.mxu0 0.0
        %621 = vmatmul.mubr.f32.gmra.mrb[0].mxu0 %v477
        %v622 = vpop.f32.mrb[0].mxu0
        %v623 = vadd.f32 %v431, %v622
        %v624 = vpop.f32.mrb[0].mxu0
        %625 = vmatprep.mubr.f32.mxu0 0.0
        %626 = vmatmul.mubr.f32.gmra.mrb[0].mxu0 %v480
        %v627 = vpop.f32.mrb[0].mxu0
        %v628 = vadd.f32 %v431, %v627
        %v629 = vpop.f32.mrb[0].mxu0
        %630 = vdwg.mxu0
        %v631 = vmax.f32 %v553, 0.0
        %v632 = vmax.f32 %v558, 0.0
        %v633 = vmax.f32 %v563, 0.0
        %v634 = vmax.f32 %v568, 0.0
        %v635 = vmax.f32 %v573, 0.0
        %v636 = vmax.f32 %v578, 0.0
        %v637 = vmax.f32 %v583, 0.0
        %v638 = vmax.f32 %v588, 0.0
        %v639 = vmax.f32 %v593, 0.0
        %v640 = vmax.f32 %v598, 0.0
        %v641 = vmax.f32 %v603, 0.0
        %v642 = vmax.f32 %v608, 0.0
        %v643 = vmax.f32 %v613, 0.0
        %v644 = vmax.f32 %v618, 0.0
        %v645 = vmax.f32 %v623, 0.0
        %v646 = vmax.f32 %v628, 0.0
        %v647 = vld [vmem:[%s3] sm:$0xff]
        %v648 = vld [vmem:[%s3 + $0x8] sm:$0xff]
        %v649 = vld [vmem:[%s3 + $0x10] sm:$0xff]
        %v650 = vld [vmem:[%s3 + $0x18] sm:$0xff]
        %v651 = vld [vmem:[%s3 + $0x20] sm:$0xff]
        %v652 = vld [vmem:[%s3 + $0x28] sm:$0xff]
        %v653 = vld [vmem:[%s3 + $0x30] sm:$0xff]
        %v654 = vld [vmem:[%s3 + $0x38] sm:$0xf]
        %v655 = vld [vmem:[%s4] sm:$0x1]
        %v657 = vlaneseq
        %v658 = vshrl.u32 %v657, 7
        %v659 = vsub.s32 0, %v658
        %v660 = vrot.slane %v655, %v659
        %vm662 = vcmask 490496
        %v664 = vsel %vm662, %v631, 0
        %v667 = vsel %vm662, %v632, 0
        %v670 = vsel %vm662, %v633, 0
        %v673 = vsel %vm662, %v634, 0
        %v676 = vsel %vm662, %v635, 0
        %v679 = vsel %vm662, %v636, 0
        %v682 = vsel %vm662, %v637, 0
        %v685 = vsel %vm662, %v638, 0
        %v688 = vsel %vm662, %v639, 0
        %v691 = vsel %vm662, %v640, 0
        %v694 = vsel %vm662, %v641, 0
        %v697 = vsel %vm662, %v642, 0
        %v700 = vsel %vm662, %v643, 0
        %v703 = vsel %vm662, %v644, 0
        %v706 = vsel %vm662, %v645, 0
        %v709 = vsel %vm662, %v646, 0
        %v712 = vsel %vm482, %v654, 0
        %714 = vmatprep.subr.mxu0 0.0
        %715 = vmatpush1.msra.mxu0 %v647
        %716 = vmatprep.subr.mxu0 0.0
        %717 = vmatpush1.msra.mxu0 %v648
        %718 = vmatprep.subr.mxu0 0.0
        %719 = vmatpush1.msra.mxu0 %v649
        %720 = vmatprep.subr.mxu0 0.0
        %721 = vmatpush1.msra.mxu0 %v650
        %722 = vmatprep.subr.mxu0 0.0
        %723 = vmatpush1.msra.mxu0 %v651
        %724 = vmatprep.subr.mxu0 0.0
        %725 = vmatpush1.msra.mxu0 %v652
        %726 = vmatprep.subr.mxu0 0.0
        %727 = vmatpush1.msra.mxu0 %v653
        %728 = vmatprep.subr.mxu0 0.0
        %729 = vmatpush1.msra.mxu0 %v712
        %730 = vmatprep.subr.mxu0 0.0
        %731 = vmatpush1.msra.mxu0 0.0
        %732 = vmatprep.subr.mxu0 0.0
        %733 = vmatpush1.msra.mxu0 0.0
        %734 = vmatprep.subr.mxu0 0.0
        %735 = vmatpush1.msra.mxu0 0.0
        %736 = vmatprep.subr.mxu0 0.0
        %737 = vmatpush1.msra.mxu0 0.0
        %738 = vmatprep.subr.mxu0 0.0
        %739 = vmatpush1.msra.mxu0 0.0
        %740 = vmatprep.subr.mxu0 0.0
        %741 = vmatpush1.msra.mxu0 0.0
        %742 = vmatprep.subr.mxu0 0.0
        %743 = vmatpush1.msra.mxu0 0.0
        %744 = vmatprep.subr.mxu0 0.0
        %745 = vmatpush1.msra.mxu0 0.0
        %746 = vmatprep.subr.mxu0 0.0
        %747 = vmatpush1.msra.mxu0 0.0
        %748 = vmatprep.subr.mxu0 0.0
        %749 = vmatpush1.msra.mxu0 0.0
        %750 = vmatprep.subr.mxu0 0.0
        %751 = vmatpush1.msra.mxu0 0.0
        %752 = vmatprep.subr.mxu0 0.0
        %753 = vmatpush1.msra.mxu0 0.0
        %754 = vmatprep.subr.mxu0 0.0
        %755 = vmatpush1.msra.mxu0 0.0
        %756 = vmatprep.subr.mxu0 0.0
        %757 = vmatpush1.msra.mxu0 0.0
        %758 = vmatprep.subr.mxu0 0.0
        %759 = vmatpush1.msra.mxu0 0.0
        %760 = vmatprep.subr.mxu0 0.0
        %761 = vmatpush1.msra.mxu0 0.0
        %762 = vmatprep.subr.mxu0 0.0
        %763 = vmatpush1.msra.mxu0 0.0
        %764 = vmatprep.subr.mxu0 0.0
        %765 = vmatpush1.msra.mxu0 0.0
        %766 = vmatprep.subr.mxu0 0.0
        %767 = vmatpush1.msra.mxu0 0.0
        %768 = vmatprep.subr.mxu0 0.0
        %769 = vmatpush1.msra.mxu0 0.0
        %770 = vmatprep.subr.mxu0 0.0
        %771 = vmatpush1.msra.mxu0 0.0
        %772 = vmatprep.subr.mxu0 0.0
        %773 = vmatpush1.msra.mxu0 0.0
        %774 = vmatprep.subr.mxu0 0.0
        %775 = vmatpush1.msra.mxu0 0.0
        %776 = vmatprep.subr.mxu0 0.0
        %777 = vmatpush1.msra.mxu0 0.0
        %778 = vmatprep.mubr.f32.mxu0 0.0
        %779 = vmatmul.mubr.f32.gmra.mrb[0].mxu0 %v664
        %v780 = vpop.f32.mrb[0].mxu0
        %v781 = vadd.f32 %v660, %v780
        %v782 = vpop.f32.mrb[0].mxu0
        %783 = vmatprep.mubr.f32.mxu0 0.0
        %784 = vmatmul.mubr.f32.gmra.mrb[0].mxu0 %v667
        %v785 = vpop.f32.mrb[0].mxu0
        %v786 = vadd.f32 %v660, %v785
        %v787 = vpop.f32.mrb[0].mxu0
        %788 = vmatprep.mubr.f32.mxu0 0.0
        %789 = vmatmul.mubr.f32.gmra.mrb[0].mxu0 %v670
        %v790 = vpop.f32.mrb[0].mxu0
        %v791 = vadd.f32 %v660, %v790
        %v792 = vpop.f32.mrb[0].mxu0
        %793 = vmatprep.mubr.f32.mxu0 0.0
        %794 = vmatmul.mubr.f32.gmra.mrb[0].mxu0 %v673
        %v795 = vpop.f32.mrb[0].mxu0
        %v796 = vadd.f32 %v660, %v795
        %v797 = vpop.f32.mrb[0].mxu0
        %798 = vmatprep.mubr.f32.mxu0 0.0
        %799 = vmatmul.mubr.f32.gmra.mrb[0].mxu0 %v676
        %v800 = vpop.f32.mrb[0].mxu0
        %v801 = vadd.f32 %v660, %v800
        %v802 = vpop.f32.mrb[0].mxu0
        %803 = vmatprep.mubr.f32.mxu0 0.0
        %804 = vmatmul.mubr.f32.gmra.mrb[0].mxu0 %v679
        %v805 = vpop.f32.mrb[0].mxu0
        %v806 = vadd.f32 %v660, %v805
        %v807 = vpop.f32.mrb[0].mxu0
        %808 = vmatprep.mubr.f32.mxu0 0.0
        %809 = vmatmul.mubr.f32.gmra.mrb[0].mxu0 %v682
        %v810 = vpop.f32.mrb[0].mxu0
        %v811 = vadd.f32 %v660, %v810
        %v812 = vpop.f32.mrb[0].mxu0
        %813 = vmatprep.mubr.f32.mxu0 0.0
        %814 = vmatmul.mubr.f32.gmra.mrb[0].mxu0 %v685
        %v815 = vpop.f32.mrb[0].mxu0
        %v816 = vadd.f32 %v660, %v815
        %v817 = vpop.f32.mrb[0].mxu0
        %818 = vmatprep.mubr.f32.mxu0 0.0
        %819 = vmatmul.mubr.f32.gmra.mrb[0].mxu0 %v688
        %v820 = vpop.f32.mrb[0].mxu0
        %v821 = vadd.f32 %v660, %v820
        %v822 = vpop.f32.mrb[0].mxu0
        %823 = vmatprep.mubr.f32.mxu0 0.0
        %824 = vmatmul.mubr.f32.gmra.mrb[0].mxu0 %v691
        %v825 = vpop.f32.mrb[0].mxu0
        %v826 = vadd.f32 %v660, %v825
        %v827 = vpop.f32.mrb[0].mxu0
        %828 = vmatprep.mubr.f32.mxu0 0.0
        %829 = vmatmul.mubr.f32.gmra.mrb[0].mxu0 %v694
        %v830 = vpop.f32.mrb[0].mxu0
        %v831 = vadd.f32 %v660, %v830
        %v832 = vpop.f32.mrb[0].mxu0
        %833 = vmatprep.mubr.f32.mxu0 0.0
        %834 = vmatmul.mubr.f32.gmra.mrb[0].mxu0 %v697
        %v835 = vpop.f32.mrb[0].mxu0
        %v836 = vadd.f32 %v660, %v835
        %v837 = vpop.f32.mrb[0].mxu0
        %838 = vmatprep.mubr.f32.mxu0 0.0
        %839 = vmatmul.mubr.f32.gmra.mrb[0].mxu0 %v700
        %v840 = vpop.f32.mrb[0].mxu0
        %v841 = vadd.f32 %v660, %v840
        %v842 = vpop.f32.mrb[0].mxu0
        %843 = vmatprep.mubr.f32.mxu0 0.0
        %844 = vmatmul.mubr.f32.gmra.mrb[0].mxu0 %v703
        %v845 = vpop.f32.mrb[0].mxu0
        %v846 = vadd.f32 %v660, %v845
        %v847 = vpop.f32.mrb[0].mxu0
        %848 = vmatprep.mubr.f32.mxu0 0.0
        %849 = vmatmul.mubr.f32.gmra.mrb[0].mxu0 %v706
        %v850 = vpop.f32.mrb[0].mxu0
        %v851 = vadd.f32 %v660, %v850
        %v852 = vpop.f32.mrb[0].mxu0
        %853 = vmatprep.mubr.f32.mxu0 0.0
        %854 = vmatmul.mubr.f32.gmra.mrb[0].mxu0 %v709
        %v855 = vpop.f32.mrb[0].mxu0
        %v856 = vadd.f32 %v660, %v855
        %v857 = vpop.f32.mrb[0].mxu0
        %858 = vdwg.mxu0
        %v859 = vmax.f32 %v781, 0.0
        %v860 = vmax.f32 %v786, 0.0
        %v861 = vmax.f32 %v791, 0.0
        %v862 = vmax.f32 %v796, 0.0
        %v863 = vmax.f32 %v801, 0.0
        %v864 = vmax.f32 %v806, 0.0
        %v865 = vmax.f32 %v811, 0.0
        %v866 = vmax.f32 %v816, 0.0
        %v867 = vmax.f32 %v821, 0.0
        %v868 = vmax.f32 %v826, 0.0
        %v869 = vmax.f32 %v831, 0.0
        %v870 = vmax.f32 %v836, 0.0
        %v871 = vmax.f32 %v841, 0.0
        %v872 = vmax.f32 %v846, 0.0
        %v873 = vmax.f32 %v851, 0.0
        %v874 = vmax.f32 %v856, 0.0
        %v875 = vld [vmem:[%s5] sm:$0xff]
        %v876 = vld [vmem:[%s5 + $0x8] sm:$0xff]
        %v877 = vld [vmem:[%s5 + $0x10] sm:$0xff]
        %v878 = vld [vmem:[%s5 + $0x18] sm:$0xff]
        %v879 = vld [vmem:[%s5 + $0x20] sm:$0xff]
        %v880 = vld [vmem:[%s5 + $0x28] sm:$0xff]
        %v881 = vld [vmem:[%s5 + $0x30] sm:$0xff]
        %v882 = vld [vmem:[%s5 + $0x38] sm:$0xf]
        %v883 = vld [vmem:[%s6] sm:$0x1]
        %v885 = vlaneseq
        %v886 = vshrl.u32 %v885, 7
        %v887 = vsub.s32 0, %v886
        %v888 = vrot.slane %v883, %v887
        %v891 = vsel %vm662, %v859, 0
        %v894 = vsel %vm662, %v860, 0
        %v897 = vsel %vm662, %v861, 0
        %v900 = vsel %vm662, %v862, 0
        %v903 = vsel %vm662, %v863, 0
        %v906 = vsel %vm662, %v864, 0
        %v909 = vsel %vm662, %v865, 0
        %v912 = vsel %vm662, %v866, 0
        %v915 = vsel %vm662, %v867, 0
        %v918 = vsel %vm662, %v868, 0
        %v921 = vsel %vm662, %v869, 0
        %v924 = vsel %vm662, %v870, 0
        %v927 = vsel %vm662, %v871, 0
        %v930 = vsel %vm662, %v872, 0
        %v933 = vsel %vm662, %v873, 0
        %v936 = vsel %vm662, %v874, 0
        %v939 = vsel %vm482, %v882, 0
        %941 = vmatprep.subr.mxu0 0.0
        %942 = vmatpush1.msra.mxu0 %v875
        %943 = vmatprep.subr.mxu0 0.0
        %944 = vmatpush1.msra.mxu0 %v876
        %945 = vmatprep.subr.mxu0 0.0
        %946 = vmatpush1.msra.mxu0 %v877
        %947 = vmatprep.subr.mxu0 0.0
        %948 = vmatpush1.msra.mxu0 %v878
        %949 = vmatprep.subr.mxu0 0.0
        %950 = vmatpush1.msra.mxu0 %v879
        %951 = vmatprep.subr.mxu0 0.0
        %952 = vmatpush1.msra.mxu0 %v880
        %953 = vmatprep.subr.mxu0 0.0
        %954 = vmatpush1.msra.mxu0 %v881
        %955 = vmatprep.subr.mxu0 0.0
        %956 = vmatpush1.msra.mxu0 %v939
        %957 = vmatprep.subr.mxu0 0.0
        %958 = vmatpush1.msra.mxu0 0.0
        %959 = vmatprep.subr.mxu0 0.0
        %960 = vmatpush1.msra.mxu0 0.0
        %961 = vmatprep.subr.mxu0 0.0
        %962 = vmatpush1.msra.mxu0 0.0
        %963 = vmatprep.subr.mxu0 0.0
        %964 = vmatpush1.msra.mxu0 0.0
        %965 = vmatprep.subr.mxu0 0.0
        %966 = vmatpush1.msra.mxu0 0.0
        %967 = vmatprep.subr.mxu0 0.0
        %968 = vmatpush1.msra.mxu0 0.0
        %969 = vmatprep.subr.mxu0 0.0
        %970 = vmatpush1.msra.mxu0 0.0
        %971 = vmatprep.subr.mxu0 0.0
        %972 = vmatpush1.msra.mxu0 0.0
        %973 = vmatprep.subr.mxu0 0.0
        %974 = vmatpush1.msra.mxu0 0.0
        %975 = vmatprep.subr.mxu0 0.0
        %976 = vmatpush1.msra.mxu0 0.0
        %977 = vmatprep.subr.mxu0 0.0
        %978 = vmatpush1.msra.mxu0 0.0
        %979 = vmatprep.subr.mxu0 0.0
        %980 = vmatpush1.msra.mxu0 0.0
        %981 = vmatprep.subr.mxu0 0.0
        %982 = vmatpush1.msra.mxu0 0.0
        %983 = vmatprep.subr.mxu0 0.0
        %984 = vmatpush1.msra.mxu0 0.0
        %985 = vmatprep.subr.mxu0 0.0
        %986 = vmatpush1.msra.mxu0 0.0
        %987 = vmatprep.subr.mxu0 0.0
        %988 = vmatpush1.msra.mxu0 0.0
        %989 = vmatprep.subr.mxu0 0.0
        %990 = vmatpush1.msra.mxu0 0.0
        %991 = vmatprep.subr.mxu0 0.0
        %992 = vmatpush1.msra.mxu0 0.0
        %993 = vmatprep.subr.mxu0 0.0
        %994 = vmatpush1.msra.mxu0 0.0
        %995 = vmatprep.subr.mxu0 0.0
        %996 = vmatpush1.msra.mxu0 0.0
        %997 = vmatprep.subr.mxu0 0.0
        %998 = vmatpush1.msra.mxu0 0.0
        %999 = vmatprep.subr.mxu0 0.0
        %1000 = vmatpush1.msra.mxu0 0.0
        %1001 = vmatprep.subr.mxu0 0.0
        %1002 = vmatpush1.msra.mxu0 0.0
        %1003 = vmatprep.subr.mxu0 0.0
        %1004 = vmatpush1.msra.mxu0 0.0
        %1005 = vmatprep.mubr.f32.mxu0 0.0
        %1006 = vmatmul.mubr.f32.gmra.mrb[0].mxu0 %v891
        %v1007 = vpop.f32.mrb[0].mxu0
        %v1008 = vadd.f32 %v888, %v1007
        %v1009 = vpop.f32.mrb[0].mxu0
        %1010 = vmatprep.mubr.f32.mxu0 0.0
        %1011 = vmatmul.mubr.f32.gmra.mrb[0].mxu0 %v894
        %v1012 = vpop.f32.mrb[0].mxu0
        %v1013 = vadd.f32 %v888, %v1012
        %v1014 = vpop.f32.mrb[0].mxu0
        %1015 = vmatprep.mubr.f32.mxu0 0.0
        %1016 = vmatmul.mubr.f32.gmra.mrb[0].mxu0 %v897
        %v1017 = vpop.f32.mrb[0].mxu0
        %v1018 = vadd.f32 %v888, %v1017
        %v1019 = vpop.f32.mrb[0].mxu0
        %1020 = vmatprep.mubr.f32.mxu0 0.0
        %1021 = vmatmul.mubr.f32.gmra.mrb[0].mxu0 %v900
        %v1022 = vpop.f32.mrb[0].mxu0
        %v1023 = vadd.f32 %v888, %v1022
        %v1024 = vpop.f32.mrb[0].mxu0
        %1025 = vmatprep.mubr.f32.mxu0 0.0
        %1026 = vmatmul.mubr.f32.gmra.mrb[0].mxu0 %v903
        %v1027 = vpop.f32.mrb[0].mxu0
        %v1028 = vadd.f32 %v888, %v1027
        %v1029 = vpop.f32.mrb[0].mxu0
        %1030 = vmatprep.mubr.f32.mxu0 0.0
        %1031 = vmatmul.mubr.f32.gmra.mrb[0].mxu0 %v906
        %v1032 = vpop.f32.mrb[0].mxu0
        %v1033 = vadd.f32 %v888, %v1032
        %v1034 = vpop.f32.mrb[0].mxu0
        %1035 = vmatprep.mubr.f32.mxu0 0.0
        %1036 = vmatmul.mubr.f32.gmra.mrb[0].mxu0 %v909
        %v1037 = vpop.f32.mrb[0].mxu0
        %v1038 = vadd.f32 %v888, %v1037
        %v1039 = vpop.f32.mrb[0].mxu0
        %1040 = vmatprep.mubr.f32.mxu0 0.0
        %1041 = vmatmul.mubr.f32.gmra.mrb[0].mxu0 %v912
        %v1042 = vpop.f32.mrb[0].mxu0
        %v1043 = vadd.f32 %v888, %v1042
        %v1044 = vpop.f32.mrb[0].mxu0
        %1045 = vmatprep.mubr.f32.mxu0 0.0
        %1046 = vmatmul.mubr.f32.gmra.mrb[0].mxu0 %v915
        %v1047 = vpop.f32.mrb[0].mxu0
        %v1048 = vadd.f32 %v888, %v1047
        %v1049 = vpop.f32.mrb[0].mxu0
        %1050 = vmatprep.mubr.f32.mxu0 0.0
        %1051 = vmatmul.mubr.f32.gmra.mrb[0].mxu0 %v918
        %v1052 = vpop.f32.mrb[0].mxu0
        %v1053 = vadd.f32 %v888, %v1052
        %v1054 = vpop.f32.mrb[0].mxu0
        %1055 = vmatprep.mubr.f32.mxu0 0.0
        %1056 = vmatmul.mubr.f32.gmra.mrb[0].mxu0 %v921
        %v1057 = vpop.f32.mrb[0].mxu0
        %v1058 = vadd.f32 %v888, %v1057
        %v1059 = vpop.f32.mrb[0].mxu0
        %1060 = vmatprep.mubr.f32.mxu0 0.0
        %1061 = vmatmul.mubr.f32.gmra.mrb[0].mxu0 %v924
        %v1062 = vpop.f32.mrb[0].mxu0
        %v1063 = vadd.f32 %v888, %v1062
        %v1064 = vpop.f32.mrb[0].mxu0
        %1065 = vmatprep.mubr.f32.mxu0 0.0
        %1066 = vmatmul.mubr.f32.gmra.mrb[0].mxu0 %v927
        %v1067 = vpop.f32.mrb[0].mxu0
        %v1068 = vadd.f32 %v888, %v1067
        %v1069 = vpop.f32.mrb[0].mxu0
        %1070 = vmatprep.mubr.f32.mxu0 0.0
        %1071 = vmatmul.mubr.f32.gmra.mrb[0].mxu0 %v930
        %v1072 = vpop.f32.mrb[0].mxu0
        %v1073 = vadd.f32 %v888, %v1072
        %v1074 = vpop.f32.mrb[0].mxu0
        %1075 = vmatprep.mubr.f32.mxu0 0.0
        %1076 = vmatmul.mubr.f32.gmra.mrb[0].mxu0 %v933
        %v1077 = vpop.f32.mrb[0].mxu0
        %v1078 = vadd.f32 %v888, %v1077
        %v1079 = vpop.f32.mrb[0].mxu0
        %1080 = vmatprep.mubr.f32.mxu0 0.0
        %1081 = vmatmul.mubr.f32.gmra.mrb[0].mxu0 %v936
        %v1082 = vpop.f32.mrb[0].mxu0
        %v1083 = vadd.f32 %v888, %v1082
        %v1084 = vpop.f32.mrb[0].mxu0
        %1085 = vdwg.mxu0
        %v1086 = vmax.f32 %v1008, 0.0
        %v1087 = vmax.f32 %v1013, 0.0
        %v1088 = vmax.f32 %v1018, 0.0
        %v1089 = vmax.f32 %v1023, 0.0
        %v1090 = vmax.f32 %v1028, 0.0
        %v1091 = vmax.f32 %v1033, 0.0
        %v1092 = vmax.f32 %v1038, 0.0
        %v1093 = vmax.f32 %v1043, 0.0
        %v1094 = vmax.f32 %v1048, 0.0
        %v1095 = vmax.f32 %v1053, 0.0
        %v1096 = vmax.f32 %v1058, 0.0
        %v1097 = vmax.f32 %v1063, 0.0
        %v1098 = vmax.f32 %v1068, 0.0
        %v1099 = vmax.f32 %v1073, 0.0
        %v1100 = vmax.f32 %v1078, 0.0
        %v1101 = vmax.f32 %v1083, 0.0
        %v1102 = vld [vmem:[%s7] sm:$0xff]
        %v1103 = vld [vmem:[%s7 + $0x8] sm:$0xff]
        %v1104 = vld [vmem:[%s7 + $0x10] sm:$0xff]
        %v1105 = vld [vmem:[%s7 + $0x18] sm:$0xff]
        %v1106 = vld [vmem:[%s7 + $0x20] sm:$0xff]
        %v1107 = vld [vmem:[%s7 + $0x28] sm:$0xff]
        %v1108 = vld [vmem:[%s7 + $0x30] sm:$0xff]
        %v1109 = vld [vmem:[%s7 + $0x38] sm:$0xf]
        %v1110 = vld [vmem:[%s8] sm:$0x1]
        %v1112 = vlaneseq
        %v1113 = vshrl.u32 %v1112, 7
        %v1114 = vsub.s32 0, %v1113
        %v1115 = vrot.slane %v1110, %v1114
        %v1118 = vsel %vm662, %v1086, 0
        %v1121 = vsel %vm662, %v1087, 0
        %v1124 = vsel %vm662, %v1088, 0
        %v1127 = vsel %vm662, %v1089, 0
        %v1130 = vsel %vm662, %v1090, 0
        %v1133 = vsel %vm662, %v1091, 0
        %v1136 = vsel %vm662, %v1092, 0
        %v1139 = vsel %vm662, %v1093, 0
        %v1142 = vsel %vm662, %v1094, 0
        %v1145 = vsel %vm662, %v1095, 0
        %v1148 = vsel %vm662, %v1096, 0
        %v1151 = vsel %vm662, %v1097, 0
        %v1154 = vsel %vm662, %v1098, 0
        %v1157 = vsel %vm662, %v1099, 0
        %v1160 = vsel %vm662, %v1100, 0
        %v1163 = vsel %vm662, %v1101, 0
        %v1166 = vsel %vm482, %v1109, 0
        %1168 = vmatprep.subr.mxu0 0.0
        %1169 = vmatpush1.msra.mxu0 %v1102
        %1170 = vmatprep.subr.mxu0 0.0
        %1171 = vmatpush1.msra.mxu0 %v1103
        %1172 = vmatprep.subr.mxu0 0.0
        %1173 = vmatpush1.msra.mxu0 %v1104
        %1174 = vmatprep.subr.mxu0 0.0
        %1175 = vmatpush1.msra.mxu0 %v1105
        %1176 = vmatprep.subr.mxu0 0.0
        %1177 = vmatpush1.msra.mxu0 %v1106
        %1178 = vmatprep.subr.mxu0 0.0
        %1179 = vmatpush1.msra.mxu0 %v1107
        %1180 = vmatprep.subr.mxu0 0.0
        %1181 = vmatpush1.msra.mxu0 %v1108
        %1182 = vmatprep.subr.mxu0 0.0
        %1183 = vmatpush1.msra.mxu0 %v1166
        %1184 = vmatprep.subr.mxu0 0.0
        %1185 = vmatpush1.msra.mxu0 0.0
        %1186 = vmatprep.subr.mxu0 0.0
        %1187 = vmatpush1.msra.mxu0 0.0
        %1188 = vmatprep.subr.mxu0 0.0
        %1189 = vmatpush1.msra.mxu0 0.0
        %1190 = vmatprep.subr.mxu0 0.0
        %1191 = vmatpush1.msra.mxu0 0.0
        %1192 = vmatprep.subr.mxu0 0.0
        %1193 = vmatpush1.msra.mxu0 0.0
        %1194 = vmatprep.subr.mxu0 0.0
        %1195 = vmatpush1.msra.mxu0 0.0
        %1196 = vmatprep.subr.mxu0 0.0
        %1197 = vmatpush1.msra.mxu0 0.0
        %1198 = vmatprep.subr.mxu0 0.0
        %1199 = vmatpush1.msra.mxu0 0.0
        %1200 = vmatprep.subr.mxu0 0.0
        %1201 = vmatpush1.msra.mxu0 0.0
        %1202 = vmatprep.subr.mxu0 0.0
        %1203 = vmatpush1.msra.mxu0 0.0
        %1204 = vmatprep.subr.mxu0 0.0
        %1205 = vmatpush1.msra.mxu0 0.0
        %1206 = vmatprep.subr.mxu0 0.0
        %1207 = vmatpush1.msra.mxu0 0.0
        %1208 = vmatprep.subr.mxu0 0.0
        %1209 = vmatpush1.msra.mxu0 0.0
        %1210 = vmatprep.subr.mxu0 0.0
        %1211 = vmatpush1.msra.mxu0 0.0
        %1212 = vmatprep.subr.mxu0 0.0
        %1213 = vmatpush1.msra.mxu0 0.0
        %1214 = vmatprep.subr.mxu0 0.0
        %1215 = vmatpush1.msra.mxu0 0.0
        %1216 = vmatprep.subr.mxu0 0.0
        %1217 = vmatpush1.msra.mxu0 0.0
        %1218 = vmatprep.subr.mxu0 0.0
        %1219 = vmatpush1.msra.mxu0 0.0
        %1220 = vmatprep.subr.mxu0 0.0
        %1221 = vmatpush1.msra.mxu0 0.0
        %1222 = vmatprep.subr.mxu0 0.0
        %1223 = vmatpush1.msra.mxu0 0.0
        %1224 = vmatprep.subr.mxu0 0.0
        %1225 = vmatpush1.msra.mxu0 0.0
        %1226 = vmatprep.subr.mxu0 0.0
        %1227 = vmatpush1.msra.mxu0 0.0
        %1228 = vmatprep.subr.mxu0 0.0
        %1229 = vmatpush1.msra.mxu0 0.0
        %1230 = vmatprep.subr.mxu0 0.0
        %1231 = vmatpush1.msra.mxu0 0.0
        %1232 = vmatprep.mubr.f32.mxu0 0.0
        %1233 = vmatmul.mubr.f32.gmra.mrb[0].mxu0 %v1118
        %v1234 = vpop.f32.mrb[0].mxu0
        %v1235 = vadd.f32 %v1115, %v1234
        %v1236 = vpop.f32.mrb[0].mxu0
        %1237 = vmatprep.mubr.f32.mxu0 0.0
        %1238 = vmatmul.mubr.f32.gmra.mrb[0].mxu0 %v1121
        %v1239 = vpop.f32.mrb[0].mxu0
        %v1240 = vadd.f32 %v1115, %v1239
        %v1241 = vpop.f32.mrb[0].mxu0
        %1242 = vmatprep.mubr.f32.mxu0 0.0
        %1243 = vmatmul.mubr.f32.gmra.mrb[0].mxu0 %v1124
        %v1244 = vpop.f32.mrb[0].mxu0
        %v1245 = vadd.f32 %v1115, %v1244
        %v1246 = vpop.f32.mrb[0].mxu0
        %1247 = vmatprep.mubr.f32.mxu0 0.0
        %1248 = vmatmul.mubr.f32.gmra.mrb[0].mxu0 %v1127
        %v1249 = vpop.f32.mrb[0].mxu0
        %v1250 = vadd.f32 %v1115, %v1249
        %v1251 = vpop.f32.mrb[0].mxu0
        %1252 = vmatprep.mubr.f32.mxu0 0.0
        %1253 = vmatmul.mubr.f32.gmra.mrb[0].mxu0 %v1130
        %v1254 = vpop.f32.mrb[0].mxu0
        %v1255 = vadd.f32 %v1115, %v1254
        %v1256 = vpop.f32.mrb[0].mxu0
        %1257 = vmatprep.mubr.f32.mxu0 0.0
        %1258 = vmatmul.mubr.f32.gmra.mrb[0].mxu0 %v1133
        %v1259 = vpop.f32.mrb[0].mxu0
        %v1260 = vadd.f32 %v1115, %v1259
        %v1261 = vpop.f32.mrb[0].mxu0
        %1262 = vmatprep.mubr.f32.mxu0 0.0
        %1263 = vmatmul.mubr.f32.gmra.mrb[0].mxu0 %v1136
        %v1264 = vpop.f32.mrb[0].mxu0
        %v1265 = vadd.f32 %v1115, %v1264
        %v1266 = vpop.f32.mrb[0].mxu0
        %1267 = vmatprep.mubr.f32.mxu0 0.0
        %1268 = vmatmul.mubr.f32.gmra.mrb[0].mxu0 %v1139
        %v1269 = vpop.f32.mrb[0].mxu0
        %v1270 = vadd.f32 %v1115, %v1269
        %v1271 = vpop.f32.mrb[0].mxu0
        %1272 = vmatprep.mubr.f32.mxu0 0.0
        %1273 = vmatmul.mubr.f32.gmra.mrb[0].mxu0 %v1142
        %v1274 = vpop.f32.mrb[0].mxu0
        %v1275 = vadd.f32 %v1115, %v1274
        %v1276 = vpop.f32.mrb[0].mxu0
        %1277 = vmatprep.mubr.f32.mxu0 0.0
        %1278 = vmatmul.mubr.f32.gmra.mrb[0].mxu0 %v1145
        %v1279 = vpop.f32.mrb[0].mxu0
        %v1280 = vadd.f32 %v1115, %v1279
        %v1281 = vpop.f32.mrb[0].mxu0
        %1282 = vmatprep.mubr.f32.mxu0 0.0
        %1283 = vmatmul.mubr.f32.gmra.mrb[0].mxu0 %v1148
        %v1284 = vpop.f32.mrb[0].mxu0
        %v1285 = vadd.f32 %v1115, %v1284
        %v1286 = vpop.f32.mrb[0].mxu0
        %1287 = vmatprep.mubr.f32.mxu0 0.0
        %1288 = vmatmul.mubr.f32.gmra.mrb[0].mxu0 %v1151
        %v1289 = vpop.f32.mrb[0].mxu0
        %v1290 = vadd.f32 %v1115, %v1289
        %v1291 = vpop.f32.mrb[0].mxu0
        %1292 = vmatprep.mubr.f32.mxu0 0.0
        %1293 = vmatmul.mubr.f32.gmra.mrb[0].mxu0 %v1154
        %v1294 = vpop.f32.mrb[0].mxu0
        %v1295 = vadd.f32 %v1115, %v1294
        %v1296 = vpop.f32.mrb[0].mxu0
        %1297 = vmatprep.mubr.f32.mxu0 0.0
        %1298 = vmatmul.mubr.f32.gmra.mrb[0].mxu0 %v1157
        %v1299 = vpop.f32.mrb[0].mxu0
        %v1300 = vadd.f32 %v1115, %v1299
        %v1301 = vpop.f32.mrb[0].mxu0
        %1302 = vmatprep.mubr.f32.mxu0 0.0
        %1303 = vmatmul.mubr.f32.gmra.mrb[0].mxu0 %v1160
        %v1304 = vpop.f32.mrb[0].mxu0
        %v1305 = vadd.f32 %v1115, %v1304
        %v1306 = vpop.f32.mrb[0].mxu0
        %1307 = vmatprep.mubr.f32.mxu0 0.0
        %1308 = vmatmul.mubr.f32.gmra.mrb[0].mxu0 %v1163
        %v1309 = vpop.f32.mrb[0].mxu0
        %v1310 = vadd.f32 %v1115, %v1309
        %v1311 = vpop.f32.mrb[0].mxu0
        %1312 = vdwg.mxu0
        %v1313 = vmax.f32 %v1235, 0.0
        %v1314 = vmax.f32 %v1240, 0.0
        %v1315 = vmax.f32 %v1245, 0.0
        %v1316 = vmax.f32 %v1250, 0.0
        %v1317 = vmax.f32 %v1255, 0.0
        %v1318 = vmax.f32 %v1260, 0.0
        %v1319 = vmax.f32 %v1265, 0.0
        %v1320 = vmax.f32 %v1270, 0.0
        %v1321 = vmax.f32 %v1275, 0.0
        %v1322 = vmax.f32 %v1280, 0.0
        %v1323 = vmax.f32 %v1285, 0.0
        %v1324 = vmax.f32 %v1290, 0.0
        %v1325 = vmax.f32 %v1295, 0.0
        %v1326 = vmax.f32 %v1300, 0.0
        %v1327 = vmax.f32 %v1305, 0.0
        %v1328 = vmax.f32 %v1310, 0.0
        %v1329 = vld [vmem:[%s9] sm:$0xff]
        %v1330 = vld [vmem:[%s9 + $0x8] sm:$0x3]
        %v1331 = vld [vmem:[%s10] sm:$0xff]
        %v1332 = vld [vmem:[%s10 + $0x8] sm:$0x3]
        %1334 = vset.pattern.permute.xlu0 0
        %1335 = vperm.xlu0 %1334, %v1331
        %v1336 = vpop.permute.xlu0 %1335
        %1339 = vset.pattern.permute.xlu0 0
        %1340 = vperm.xlu0 %1339, %v1332
        %v1341 = vpop.permute.xlu0 %1340
        %v1344 = vsel %vm662, %v1329, 0
        %v1347 = vsel %vm662, %v1330, 0
        %v1350 = vsel %vm662, %v1313, 0
        %v1353 = vsel %vm662, %v1314, 0
        %v1356 = vsel %vm662, %v1315, 0
        %v1359 = vsel %vm662, %v1316, 0
        %v1362 = vsel %vm662, %v1317, 0
        %v1365 = vsel %vm662, %v1318, 0
        %v1368 = vsel %vm662, %v1319, 0
        %v1371 = vsel %vm662, %v1320, 0
        %v1374 = vsel %vm662, %v1321, 0
        %v1377 = vsel %vm662, %v1322, 0
        %v1380 = vsel %vm662, %v1323, 0
        %v1383 = vsel %vm662, %v1324, 0
        %v1386 = vsel %vm662, %v1325, 0
        %v1389 = vsel %vm662, %v1326, 0
        %v1392 = vsel %vm662, %v1327, 0
        %v1395 = vsel %vm662, %v1328, 0
        %1397 = vmatprep.subr.mxu0 0.0
        %1398 = vmatpush1.xpose.msra.mxu0 %v1350
        %1399 = vmatprep.subr.mxu0 0.0
        %1400 = vmatpush1.xpose.msra.mxu0 %v1353
        %1401 = vmatprep.subr.mxu0 0.0
        %1402 = vmatpush1.xpose.msra.mxu0 %v1356
        %1403 = vmatprep.subr.mxu0 0.0
        %1404 = vmatpush1.xpose.msra.mxu0 %v1359
        %1405 = vmatprep.subr.mxu0 0.0
        %1406 = vmatpush1.xpose.msra.mxu0 %v1362
        %1407 = vmatprep.subr.mxu0 0.0
        %1408 = vmatpush1.xpose.msra.mxu0 %v1365
        %1409 = vmatprep.subr.mxu0 0.0
        %1410 = vmatpush1.xpose.msra.mxu0 %v1368
        %1411 = vmatprep.subr.mxu0 0.0
        %1412 = vmatpush1.xpose.msra.mxu0 %v1371
        %1413 = vmatprep.subr.mxu0 0.0
        %1414 = vmatpush1.xpose.msra.mxu0 %v1374
        %1415 = vmatprep.subr.mxu0 0.0
        %1416 = vmatpush1.xpose.msra.mxu0 %v1377
        %1417 = vmatprep.subr.mxu0 0.0
        %1418 = vmatpush1.xpose.msra.mxu0 %v1380
        %1419 = vmatprep.subr.mxu0 0.0
        %1420 = vmatpush1.xpose.msra.mxu0 %v1383
        %1421 = vmatprep.subr.mxu0 0.0
        %1422 = vmatpush1.xpose.msra.mxu0 %v1386
        %1423 = vmatprep.subr.mxu0 0.0
        %1424 = vmatpush1.xpose.msra.mxu0 %v1389
        %1425 = vmatprep.subr.mxu0 0.0
        %1426 = vmatpush1.xpose.msra.mxu0 %v1392
        %1427 = vmatprep.subr.mxu0 0.0
        %1428 = vmatpush1.xpose.msra.mxu0 %v1395
        %1429 = vmatprep.subr.mxu0 0.0
        %1430 = vmatpush1.xpose.msra.mxu0 0.0
        %1431 = vmatprep.subr.mxu0 0.0
        %1432 = vmatpush1.xpose.msra.mxu0 0.0
        %1433 = vmatprep.subr.mxu0 0.0
        %1434 = vmatpush1.xpose.msra.mxu0 0.0
        %1435 = vmatprep.subr.mxu0 0.0
        %1436 = vmatpush1.xpose.msra.mxu0 0.0
        %1437 = vmatprep.subr.mxu0 0.0
        %1438 = vmatpush1.xpose.msra.mxu0 0.0
        %1439 = vmatprep.subr.mxu0 0.0
        %1440 = vmatpush1.xpose.msra.mxu0 0.0
        %1441 = vmatprep.subr.mxu0 0.0
        %1442 = vmatpush1.xpose.msra.mxu0 0.0
        %1443 = vmatprep.subr.mxu0 0.0
        %1444 = vmatpush1.xpose.msra.mxu0 0.0
        %1445 = vmatprep.subr.mxu0 0.0
        %1446 = vmatpush1.xpose.msra.mxu0 0.0
        %1447 = vmatprep.subr.mxu0 0.0
        %1448 = vmatpush1.xpose.msra.mxu0 0.0
        %1449 = vmatprep.subr.mxu0 0.0
        %1450 = vmatpush1.xpose.msra.mxu0 0.0
        %1451 = vmatprep.subr.mxu0 0.0
        %1452 = vmatpush1.xpose.msra.mxu0 0.0
        %1453 = vmatprep.subr.mxu0 0.0
        %1454 = vmatpush1.xpose.msra.mxu0 0.0
        %1455 = vmatprep.subr.mxu0 0.0
        %1456 = vmatpush1.xpose.msra.mxu0 0.0
        %1457 = vmatprep.subr.mxu0 0.0
        %1458 = vmatpush1.xpose.msra.mxu0 0.0
        %1459 = vmatprep.subr.mxu0 0.0
        %1460 = vmatpush1.xpose.msra.mxu0 0.0
        %1461 = vmatprep.mubr.f32.mxu0 0.0
        %1462 = vmatmul.mubr.f32.gmra.mrb[0].mxu0 %v1344
        %v1463 = vpop.f32.mrb[0].mxu0
        %v1464 = vadd.f32 %v1336, %v1463
        %v1465 = vpop.f32.mrb[0].mxu0
        %1466 = vmatprep.mubr.f32.mxu0 0.0
        %1467 = vmatmul.mubr.f32.gmra.mrb[0].mxu0 %v1347
        %v1468 = vpop.f32.mrb[0].mxu0
        %v1469 = vadd.f32 %v1341, %v1468
        %v1470 = vpop.f32.mrb[0].mxu0
        %1471 = vdwg.mxu0
        %vm1472 = vcmask 1041408
        %v1473 = vsel %vm1472, %v1469, -inf
        %v1474 = vmax.f32 %v1464, %v1473
        %v1475 = vrot.slane %v1474, 4
        %v1476 = vmax.f32 %v1474, %v1475
        %v1477 = vrot.slane %v1476, 2
        %v1478 = vmax.f32 %v1476, %v1477
        %v1479 = vrot.slane %v1478, 1
        %v1480 = vmax.f32 %v1478, %v1479
        %v1481 = vsub.f32 %v1464, %v1480
        %v1482 = vsub.f32 %v1469, %v1480
        %v1483 = vmul.f32 %v1481, 1.442695
        %v1484 = vpow.pop %v1483
        %v1485 = vmul.f32 %v1482, 1.442695
        %v1486 = vpow.pop %v1485
        %v1487 = vsel %vm1472, %v1486, 0.0
        %v1488 = vadd.f32 %v1484, %v1487
        %v1489 = vrot.slane %v1488, 4
        %v1490 = vadd.f32 %v1488, %v1489
        %v1491 = vrot.slane %v1490, 2
        %v1492 = vadd.f32 %v1490, %v1491
        %v1493 = vrot.slane %v1492, 1
        %v1494 = vadd.f32 %v1492, %v1493
        %v1495 = vlog2.pop %v1494
        %v1496 = vmul.f32 %v1495, 0.6931472
        %v1497 = vsub.f32 %v1481, %v1496
        %v1498 = vsub.f32 %v1482, %v1496
        %1499 = vst [vmem:[%s392] sm:$0xff] %v1497
        %1500 = vst [vmem:[%s392 + $0x8] sm:$0x3] %v1498
        %s1501 = sand.u32 %s269, 1
        %s1502 = scalar_lea.sflag [#allocation3], %s1501
        %s1503 = sand.u32 %s269, 1
        %s1504 = smul.addr %s1503, 16
        %s1505 = scalar_lea.vmem [#allocation2], %s1504
        // Predicated region
        $region65: #{tpu_custom_call.1} parent=63 // pred_check
          %p1506 = pneg %p279
        $region66: #{tpu_custom_call.1} parent=63 // pred_check_branch
          %1508 = sbr.rel (%p1506) target = $region68
        $region67: #{tpu_custom_call.1} parent=63 // pred_region
          %s1510 = ssub.s32 256, 256
          %1511 = vsyncadd %s1502, %s1510
          %s1512 = smul.addr %s25, 128
          %s1513 = scalar_lea.hbm %s11, %s1512
          %s1514 = sshll.u32 %s1505, 4
          %s1515 = int_to_ptr.vmem [resolvable:$true] %s1514
          %1520 = dma.vmem_to_hbm [thread:$0]  %s1515, 256, %s1513, %s1502, 128, 256, 8
        $region68: #{tpu_custom_call.1} parent=63 // pred_fallthru
          _
      $region64: #{tpu_custom_call.1} parent=5 // pred_fallthru
        _
      %p1521 = scmp.le.s32.totalorder 2, %s20
      // Predicated region
      $region69: #{tpu_custom_call.1} parent=5 // pred_check
        %p1522 = pneg %p1521
      $region70: #{tpu_custom_call.1} parent=5 // pred_check_branch
        %1524 = sbr.rel (%p1522) target = $region72
      $region71: #{tpu_custom_call.1} parent=5 // pred_region
        %s1525 = ssub.s32 %s20, 2
        // Predicated region
        $region73: #{tpu_custom_call.1} parent=71 // pred_check
          %p1526 = pneg %p285
        $region74: #{tpu_custom_call.1} parent=71 // pred_check_branch
          %1528 = sbr.rel (%p1526) target = $region76
        $region75: #{tpu_custom_call.1} parent=71 // pred_region
          %s1529 = sand.u32 %s270, 1
          %s1530 = scalar_lea.sflag [#allocation3], %s1529
          %s1531 = sand.u32 %s270, 1
          %s1532 = smul.addr %s1531, 16
          %s1533 = scalar_lea.vmem [#allocation2], %s1532
          %1534 = dma.done %s1530, 256
        $region76: #{tpu_custom_call.1} parent=71 // pred_fallthru
          _
      $region72: #{tpu_custom_call.1} parent=5 // pred_fallthru
        _
    $region6: #{tpu_custom_call.1} parent=1 // loop_footer
      %s24 = sadd.s32 1, %s20
    $region7: #{tpu_custom_call.1} parent=1 // loop_footer_branch
      %19 = sbr.rel target = $region3
    $region8: #{tpu_custom_call.1} parent=1 // loop_exit
      _
    %1535 = vsyncpa [#allocation3], 1
    %s1536 = scalar_lea.sflag [#allocation3], 1
    %1537 = vsyncpa %s1536, 1

</llo_original>
